<compile_context>
chip_gen: v5e
topology: v5e:2x2
jax: 0.10.0
libtpu: 0.0.40
codegen_flags: <defaults>
</compile_context>

<pallas_src>
import functools
import math

import jax
import jax.numpy as jnp
from jax.experimental import pallas as pl
from jax.experimental.pallas import tpu as pltpu


def _attention_kernel(x_ref, kv_ref, wq_ref, wk_ref, wv_ref, wp_ref, o_ref,
                      *, num_heads, scale):
    # x_ref : (TB, Yq, C)   kv_ref: (TB, Yk, C)
    # wq/wk/wv: (C, H)      wp: (H, H)      o_ref: (TB, Yq, H)
    tb, yq, c = x_ref.shape
    _, yk, _ = kv_ref.shape
    hidden = wq_ref.shape[1]
    dh = hidden // num_heads

    x = x_ref[...]                      # native dtype, no blanket f32 upcast
    kv = kv_ref[...]
    x2 = x.reshape(tb * yq, c)
    kv2 = kv.reshape(tb * yk, c)

    # Q/K/V projections on the MXU, f32 accumulation.
    q = jnp.dot(x2, wq_ref[...],
                preferred_element_type=jnp.float32).reshape(tb, yq, hidden)
    k = jnp.dot(kv2, wk_ref[...],
                preferred_element_type=jnp.float32).reshape(tb, yk, hidden)
    v = jnp.dot(kv2, wv_ref[...],
                preferred_element_type=jnp.float32).reshape(tb, yk, hidden)

    wp = wp_ref[...]

    # Fused "concat heads -> proj": accumulate Oh @ proj[h*dh:(h+1)*dh, :].
    acc = jnp.zeros((tb * yq, hidden), dtype=jnp.float32)
    for h in range(num_heads):          # static unroll, num_heads is small
        lo = h * dh
        qh = q[:, :, lo:lo + dh]        # (tb, yq, dh)
        kh = k[:, :, lo:lo + dh]        # (tb, yk, dh)
        vh = v[:, :, lo:lo + dh]

        e = jnp.einsum('bqd,bkd->bqk', qh, kh,
                       preferred_element_type=jnp.float32) * scale
        e = e - jnp.max(e, axis=-1, keepdims=True)
        p = jnp.exp(e)
        p = p / jnp.sum(p, axis=-1, keepdims=True)

        oh = jnp.einsum('bqk,bkd->bqd', p, vh,
                        preferred_element_type=jnp.float32)     # (tb, yq, dh)

        wph = wp[lo:lo + dh, :]                                 # (dh, H)
        acc = acc + jnp.dot(oh.reshape(tb * yq, dh), wph,
                            preferred_element_type=jnp.float32)

    # TODO(synk): dropout omitted (inference identity); a training-mode variant
    # would draw the mask with pltpu.prng_seed + pltpu.prng_random_bits.
    o_ref[...] = acc.reshape(tb, yq, hidden).astype(o_ref.dtype)


def attention(x, wq, wk, wv, wp, *, num_heads=4, kv=None, block_rows=None,
              vmem_limit_bytes=48 * 1024 * 1024):
    """x: (B, X, Y, C); kv: optional (B, X, Yk, C); weights (C,H)x3, (H,H)."""
    if kv is None:
        kv = x
    B, X, Yq, C = x.shape
    Bk, Xk, Yk, Ck = kv.shape
    assert (Bk, Xk, Ck) == (B, X, C)
    hidden = wq.shape[1]
    assert wq.shape == (C, hidden) and wk.shape == (C, hidden)
    assert wv.shape == (C, hidden) and wp.shape == (hidden, hidden)
    assert hidden % num_heads == 0

    M = B * X
    x3 = x.reshape(M, Yq, C)
    kv3 = kv.reshape(M, Yk, C)

    if block_rows is None:
        # Rough per-row footprint: double-buffered x/kv/out tiles plus the f32
        # q/k/v/score/acc temporaries. Keep the tile a few MiB so everything
        # (plus resident weights) fits comfortably even in v7x's 64 MiB VMEM.
        bytes_per_row = 4 * (2 * (Yq * C + Yk * C + Yq * hidden)
                             + 3 * Yk * hidden + Yq * hidden
                             + Yq * Yk + Yq * hidden)
        block_rows = max(1, min(M, (8 * 1024 * 1024) // max(bytes_per_row, 1)))

    n_blocks = pl.cdiv(M, block_rows)
    Mp = n_blocks * block_rows
    if Mp != M:                      # pad so every grid step sees a full tile
        pad = Mp - M
        x3 = jnp.pad(x3, ((0, pad), (0, 0), (0, 0)))
        kv3 = jnp.pad(kv3, ((0, pad), (0, 0), (0, 0)))

    scale = 1.0 / math.sqrt(hidden / num_heads)
    kernel = functools.partial(_attention_kernel,
                               num_heads=num_heads, scale=scale)

    out = pl.pallas_call(
        kernel,
        out_shape=jax.ShapeDtypeStruct((Mp, Yq, hidden), x.dtype),
        grid_spec=pltpu.PrefetchScalarGridSpec(
            num_scalar_prefetch=0,
            grid=(n_blocks,),
            in_specs=[
                pl.BlockSpec((block_rows, Yq, C), lambda i: (i, 0, 0)),
                pl.BlockSpec((block_rows, Yk, C), lambda i: (i, 0, 0)),
                # Weights: same block every step -> stay resident, no re-DMA.
                pl.BlockSpec((C, hidden), lambda i: (0, 0)),
                pl.BlockSpec((C, hidden), lambda i: (0, 0)),
                pl.BlockSpec((C, hidden), lambda i: (0, 0)),
                pl.BlockSpec((hidden, hidden), lambda i: (0, 0)),
            ],
            out_specs=pl.BlockSpec((block_rows, Yq, hidden),
                                   lambda i: (i, 0, 0)),
        ),
        compiler_params=pltpu.CompilerParams(
            dimension_semantics=("parallel",),   # megacore / dual-TC sharding
            vmem_limit_bytes=vmem_limit_bytes,
        ),
    )(x3, kv3, wq, wk, wv, wp)

    return out[:M].reshape(B, X, Yq, hidden)


def _reference_attention(x, wq, wk, wv, wp, num_heads, kv=None):
    """Pure-JAX mirror of the PyTorch module (inference, dropout = identity)."""
    if kv is None:
        kv = x
    q = jnp.einsum('bxyz,zd->bxyd', x, wq)
    k = jnp.einsum('bxyz,zd->bxyd', kv, wk)
    v = jnp.einsum('bxyz,zd->bxyd', kv, wv)
    q = jnp.concatenate(jnp.split(q, num_heads, axis=-1), axis=0)
    k = jnp.concatenate(jnp.split(k, num_heads, axis=-1), axis=0)
    v = jnp.concatenate(jnp.split(v, num_heads, axis=-1), axis=0)
    e = jnp.einsum('bxyz,bxzd->bxyd', q, jnp.swapaxes(k, -1, -2))
    e = e / (wq.shape[1] / num_heads) ** 0.5
    s = jax.nn.softmax(e, axis=-1)
    ho = jnp.einsum('bxyz,bxzd->bxyd', s, v)
    out = jnp.concatenate(jnp.split(ho, num_heads, axis=0), axis=-1)
    return jnp.matmul(out, wp)


if __name__ == "__main__":
    key = jax.random.PRNGKey(0)
    kx, kq, kk, kvw, kp = jax.random.split(key, 5)

    batch, nodes, seq, in_dim, hidden, heads = 2, 4, 8, 32, 128, 4
    dropout_p = 0.1  # unused at inference

    x = jax.random.normal(kx, (batch, nodes, seq, in_dim), dtype=jnp.float32)
    # 0.1-scaled "randn" parameters keep the softmax un-saturated so the f32
    # reference comparison is meaningful.
    wq = 0.1 * jax.random.normal(kq, (in_dim, hidden), dtype=jnp.float32)
    wk = 0.1 * jax.random.normal(kk, (in_dim, hidden), dtype=jnp.float32)
    wv = 0.1 * jax.random.normal(kvw, (in_dim, hidden), dtype=jnp.float32)
    wp = 0.1 * jax.random.normal(kp, (hidden, hidden), dtype=jnp.float32)

    # block_rows=2 -> grid=(4,) so the pipelined / multi-step path is exercised.
    out = attention(x, wq, wk, wv, wp, num_heads=heads, block_rows=2)
    out = jax.block_until_ready(out)

    with jax.default_matmul_precision('float32'):
        ref = _reference_attention(x, wq, wk, wv, wp, heads)

    assert out.shape == (batch, nodes, seq, hidden)
    assert jnp.allclose(out, ref, atol=1e-3, rtol=1e-3), \
        float(jnp.max(jnp.abs(out - ref)))

    print("KERNEL_OK")
</pallas_src>

<mosaic_0001>
module attributes {stable_mosaic.version = 11 : i64} {
  func.func @_attention_kernel(%arg0: i32, %arg1: memref<2x8x32xf32, #tpu.memory_space<vmem>>, %arg2: memref<2x8x32xf32, #tpu.memory_space<vmem>>, %arg3: memref<32x128xf32, #tpu.memory_space<vmem>>, %arg4: memref<32x128xf32, #tpu.memory_space<vmem>>, %arg5: memref<32x128xf32, #tpu.memory_space<vmem>>, %arg6: memref<128x128xf32, #tpu.memory_space<vmem>>, %arg7: memref<2x8x128xf32, #tpu.memory_space<vmem>>) attributes {dimension_semantics = [#tpu.dimension_semantics<parallel>], iteration_bounds = array<i64: 4>, scalar_prefetch = 0 : i64, scratch_operands = 0 : i64, tpu.core_type = #tpu.core_type<tc>, window_params = [{transform_indices = @transform_0, window_bounds = array<i64: 2, 8, 32>}, {transform_indices = @transform_1, window_bounds = array<i64: 2, 8, 32>}, {pipeline_mode = #tpu.pipeline_mode<synchronous>, transform_indices = @transform_2, window_bounds = array<i64: 32, 128>}, {pipeline_mode = #tpu.pipeline_mode<synchronous>, transform_indices = @transform_3, window_bounds = array<i64: 32, 128>}, {pipeline_mode = #tpu.pipeline_mode<synchronous>, transform_indices = @transform_4, window_bounds = array<i64: 32, 128>}, {pipeline_mode = #tpu.pipeline_mode<synchronous>, transform_indices = @transform_5, window_bounds = array<i64: 128, 128>}, {transform_indices = @transform_6, window_bounds = array<i64: 2, 8, 128>}]} {
    %c0 = arith.constant 0 : index
    %c0_0 = arith.constant 0 : index
    %c0_1 = arith.constant 0 : index
    %0 = vector.load %arg1[%c0, %c0_0, %c0_1] : memref<2x8x32xf32, #tpu.memory_space<vmem>>, vector<2x8x32xf32>
    %c0_2 = arith.constant 0 : index
    %c0_3 = arith.constant 0 : index
    %c0_4 = arith.constant 0 : index
    %1 = vector.load %arg2[%c0_2, %c0_3, %c0_4] : memref<2x8x32xf32, #tpu.memory_space<vmem>>, vector<2x8x32xf32>
    %2 = vector.shape_cast %0 : vector<2x8x32xf32> to vector<16x32xf32>
    %3 = vector.shape_cast %1 : vector<2x8x32xf32> to vector<16x32xf32>
    %c0_5 = arith.constant 0 : index
    %c0_6 = arith.constant 0 : index
    %4 = vector.load %arg3[%c0_5, %c0_6] : memref<32x128xf32, #tpu.memory_space<vmem>>, vector<32x128xf32>
    %cst = arith.constant dense<0.000000e+00> : vector<16x128xf32>
    %5 = tpu.matmul %2, %4, %cst {dimension_numbers = #tpu.dot_dimension_numbers<[1], [0], [0], [1], [0, 0, 1, 1], [], []>} : vector<16x32xf32>, vector<32x128xf32>, vector<16x128xf32> -> vector<16x128xf32>
    %6 = vector.shape_cast %5 : vector<16x128xf32> to vector<2x8x128xf32>
    %c0_7 = arith.constant 0 : index
    %c0_8 = arith.constant 0 : index
    %7 = vector.load %arg4[%c0_7, %c0_8] : memref<32x128xf32, #tpu.memory_space<vmem>>, vector<32x128xf32>
    %cst_9 = arith.constant dense<0.000000e+00> : vector<16x128xf32>
    %8 = tpu.matmul %3, %7, %cst_9 {dimension_numbers = #tpu.dot_dimension_numbers<[1], [0], [0], [1], [0, 0, 1, 1], [], []>} : vector<16x32xf32>, vector<32x128xf32>, vector<16x128xf32> -> vector<16x128xf32>
    %9 = vector.shape_cast %8 : vector<16x128xf32> to vector<2x8x128xf32>
    %c0_10 = arith.constant 0 : index
    %c0_11 = arith.constant 0 : index
    %10 = vector.load %arg5[%c0_10, %c0_11] : memref<32x128xf32, #tpu.memory_space<vmem>>, vector<32x128xf32>
    %cst_12 = arith.constant dense<0.000000e+00> : vector<16x128xf32>
    %11 = tpu.matmul %3, %10, %cst_12 {dimension_numbers = #tpu.dot_dimension_numbers<[1], [0], [0], [1], [0, 0, 1, 1], [], []>} : vector<16x32xf32>, vector<32x128xf32>, vector<16x128xf32> -> vector<16x128xf32>
    %12 = vector.shape_cast %11 : vector<16x128xf32> to vector<2x8x128xf32>
    %c0_13 = arith.constant 0 : index
    %c0_14 = arith.constant 0 : index
    %13 = vector.load %arg6[%c0_13, %c0_14] : memref<128x128xf32, #tpu.memory_space<vmem>>, vector<128x128xf32>
    %cst_15 = arith.constant 0.000000e+00 : f32
    %14 = vector.broadcast %cst_15 : f32 to vector<16x128xf32>
    %15 = vector.extract_strided_slice %6 {offsets = [0, 0, 0], sizes = [2, 8, 32], strides = [1, 1, 1]} : vector<2x8x128xf32> to vector<2x8x32xf32>
    %16 = vector.extract_strided_slice %9 {offsets = [0, 0, 0], sizes = [2, 8, 32], strides = [1, 1, 1]} : vector<2x8x128xf32> to vector<2x8x32xf32>
    %17 = vector.extract_strided_slice %12 {offsets = [0, 0, 0], sizes = [2, 8, 32], strides = [1, 1, 1]} : vector<2x8x128xf32> to vector<2x8x32xf32>
    "tpu.trace_start"() <{level = 10 : i32, message = "bqd,bkd->bqk"}> : () -> ()
    %cst_16 = arith.constant dense<0.000000e+00> : vector<2x8x8xf32>
    %18 = tpu.matmul %15, %16, %cst_16 {dimension_numbers = #tpu.dot_dimension_numbers<[2], [2], [1], [1], [0, 0, 0, 1, 1, 1], [0], [0]>} : vector<2x8x32xf32>, vector<2x8x32xf32>, vector<2x8x8xf32> -> vector<2x8x8xf32>
    "tpu.trace_stop"() : () -> ()
    %cst_17 = arith.constant 0.176776692 : f32
    %19 = vector.broadcast %cst_17 : f32 to vector<2x8x8xf32>
    %20 = arith.mulf %18, %19 : vector<2x8x8xf32>
    %cst_18 = arith.constant dense<0xFF800000> : vector<2x8xf32>
    %21 = vector.multi_reduction <maximumf>, %20, %cst_18 [2] : vector<2x8x8xf32> to vector<2x8xf32>
    %22 = vector.shape_cast %21 : vector<2x8xf32> to vector<2x8x1xf32>
    %23 = vector.broadcast %22 : vector<2x8x1xf32> to vector<2x8x8xf32>
    %24 = arith.subf %20, %23 : vector<2x8x8xf32>
    %25 = math.exp %24 : vector<2x8x8xf32>
    %cst_19 = arith.constant dense<0.000000e+00> : vector<2x8xf32>
    %26 = vector.multi_reduction <add>, %25, %cst_19 [2] : vector<2x8x8xf32> to vector<2x8xf32>
    %27 = vector.shape_cast %26 : vector<2x8xf32> to vector<2x8x1xf32>
    %28 = vector.broadcast %27 : vector<2x8x1xf32> to vector<2x8x8xf32>
    %29 = arith.divf %25, %28 : vector<2x8x8xf32>
    "tpu.trace_start"() <{level = 10 : i32, message = "bqk,bkd->bqd"}> : () -> ()
    %cst_20 = arith.constant dense<0.000000e+00> : vector<2x8x32xf32>
    %30 = tpu.matmul %29, %17, %cst_20 {dimension_numbers = #tpu.dot_dimension_numbers<[2], [1], [1], [2], [0, 0, 0, 1, 1, 2], [0], [0]>} : vector<2x8x8xf32>, vector<2x8x32xf32>, vector<2x8x32xf32> -> vector<2x8x32xf32>
    "tpu.trace_stop"() : () -> ()
    %31 = vector.extract_strided_slice %13 {offsets = [0, 0], sizes = [32, 128], strides = [1, 1]} : vector<128x128xf32> to vector<32x128xf32>
    %32 = vector.shape_cast %30 : vector<2x8x32xf32> to vector<16x32xf32>
    %cst_21 = arith.constant dense<0.000000e+00> : vector<16x128xf32>
    %33 = tpu.matmul %32, %31, %cst_21 {dimension_numbers = #tpu.dot_dimension_numbers<[1], [0], [0], [1], [0, 0, 1, 1], [], []>} : vector<16x32xf32>, vector<32x128xf32>, vector<16x128xf32> -> vector<16x128xf32>
    %34 = arith.addf %14, %33 : vector<16x128xf32>
    %35 = vector.extract_strided_slice %6 {offsets = [0, 0, 32], sizes = [2, 8, 32], strides = [1, 1, 1]} : vector<2x8x128xf32> to vector<2x8x32xf32>
    %36 = vector.extract_strided_slice %9 {offsets = [0, 0, 32], sizes = [2, 8, 32], strides = [1, 1, 1]} : vector<2x8x128xf32> to vector<2x8x32xf32>
    %37 = vector.extract_strided_slice %12 {offsets = [0, 0, 32], sizes = [2, 8, 32], strides = [1, 1, 1]} : vector<2x8x128xf32> to vector<2x8x32xf32>
    "tpu.trace_start"() <{level = 10 : i32, message = "bqd,bkd->bqk"}> : () -> ()
    %cst_22 = arith.constant dense<0.000000e+00> : vector<2x8x8xf32>
    %38 = tpu.matmul %35, %36, %cst_22 {dimension_numbers = #tpu.dot_dimension_numbers<[2], [2], [1], [1], [0, 0, 0, 1, 1, 1], [0], [0]>} : vector<2x8x32xf32>, vector<2x8x32xf32>, vector<2x8x8xf32> -> vector<2x8x8xf32>
    "tpu.trace_stop"() : () -> ()
    %cst_23 = arith.constant 0.176776692 : f32
    %39 = vector.broadcast %cst_23 : f32 to vector<2x8x8xf32>
    %40 = arith.mulf %38, %39 : vector<2x8x8xf32>
    %cst_24 = arith.constant dense<0xFF800000> : vector<2x8xf32>
    %41 = vector.multi_reduction <maximumf>, %40, %cst_24 [2] : vector<2x8x8xf32> to vector<2x8xf32>
    %42 = vector.shape_cast %41 : vector<2x8xf32> to vector<2x8x1xf32>
    %43 = vector.broadcast %42 : vector<2x8x1xf32> to vector<2x8x8xf32>
    %44 = arith.subf %40, %43 : vector<2x8x8xf32>
    %45 = math.exp %44 : vector<2x8x8xf32>
    %cst_25 = arith.constant dense<0.000000e+00> : vector<2x8xf32>
    %46 = vector.multi_reduction <add>, %45, %cst_25 [2] : vector<2x8x8xf32> to vector<2x8xf32>
    %47 = vector.shape_cast %46 : vector<2x8xf32> to vector<2x8x1xf32>
    %48 = vector.broadcast %47 : vector<2x8x1xf32> to vector<2x8x8xf32>
    %49 = arith.divf %45, %48 : vector<2x8x8xf32>
    "tpu.trace_start"() <{level = 10 : i32, message = "bqk,bkd->bqd"}> : () -> ()
    %cst_26 = arith.constant dense<0.000000e+00> : vector<2x8x32xf32>
    %50 = tpu.matmul %49, %37, %cst_26 {dimension_numbers = #tpu.dot_dimension_numbers<[2], [1], [1], [2], [0, 0, 0, 1, 1, 2], [0], [0]>} : vector<2x8x8xf32>, vector<2x8x32xf32>, vector<2x8x32xf32> -> vector<2x8x32xf32>
    "tpu.trace_stop"() : () -> ()
    %51 = vector.extract_strided_slice %13 {offsets = [32, 0], sizes = [32, 128], strides = [1, 1]} : vector<128x128xf32> to vector<32x128xf32>
    %52 = vector.shape_cast %50 : vector<2x8x32xf32> to vector<16x32xf32>
    %cst_27 = arith.constant dense<0.000000e+00> : vector<16x128xf32>
    %53 = tpu.matmul %52, %51, %cst_27 {dimension_numbers = #tpu.dot_dimension_numbers<[1], [0], [0], [1], [0, 0, 1, 1], [], []>} : vector<16x32xf32>, vector<32x128xf32>, vector<16x128xf32> -> vector<16x128xf32>
    %54 = arith.addf %34, %53 : vector<16x128xf32>
    %55 = vector.extract_strided_slice %6 {offsets = [0, 0, 64], sizes = [2, 8, 32], strides = [1, 1, 1]} : vector<2x8x128xf32> to vector<2x8x32xf32>
    %56 = vector.extract_strided_slice %9 {offsets = [0, 0, 64], sizes = [2, 8, 32], strides = [1, 1, 1]} : vector<2x8x128xf32> to vector<2x8x32xf32>
    %57 = vector.extract_strided_slice %12 {offsets = [0, 0, 64], sizes = [2, 8, 32], strides = [1, 1, 1]} : vector<2x8x128xf32> to vector<2x8x32xf32>
    "tpu.trace_start"() <{level = 10 : i32, message = "bqd,bkd->bqk"}> : () -> ()
    %cst_28 = arith.constant dense<0.000000e+00> : vector<2x8x8xf32>
    %58 = tpu.matmul %55, %56, %cst_28 {dimension_numbers = #tpu.dot_dimension_numbers<[2], [2], [1], [1], [0, 0, 0, 1, 1, 1], [0], [0]>} : vector<2x8x32xf32>, vector<2x8x32xf32>, vector<2x8x8xf32> -> vector<2x8x8xf32>
    "tpu.trace_stop"() : () -> ()
    %cst_29 = arith.constant 0.176776692 : f32
    %59 = vector.broadcast %cst_29 : f32 to vector<2x8x8xf32>
    %60 = arith.mulf %58, %59 : vector<2x8x8xf32>
    %cst_30 = arith.constant dense<0xFF800000> : vector<2x8xf32>
    %61 = vector.multi_reduction <maximumf>, %60, %cst_30 [2] : vector<2x8x8xf32> to vector<2x8xf32>
    %62 = vector.shape_cast %61 : vector<2x8xf32> to vector<2x8x1xf32>
    %63 = vector.broadcast %62 : vector<2x8x1xf32> to vector<2x8x8xf32>
    %64 = arith.subf %60, %63 : vector<2x8x8xf32>
    %65 = math.exp %64 : vector<2x8x8xf32>
    %cst_31 = arith.constant dense<0.000000e+00> : vector<2x8xf32>
    %66 = vector.multi_reduction <add>, %65, %cst_31 [2] : vector<2x8x8xf32> to vector<2x8xf32>
    %67 = vector.shape_cast %66 : vector<2x8xf32> to vector<2x8x1xf32>
    %68 = vector.broadcast %67 : vector<2x8x1xf32> to vector<2x8x8xf32>
    %69 = arith.divf %65, %68 : vector<2x8x8xf32>
    "tpu.trace_start"() <{level = 10 : i32, message = "bqk,bkd->bqd"}> : () -> ()
    %cst_32 = arith.constant dense<0.000000e+00> : vector<2x8x32xf32>
    %70 = tpu.matmul %69, %57, %cst_32 {dimension_numbers = #tpu.dot_dimension_numbers<[2], [1], [1], [2], [0, 0, 0, 1, 1, 2], [0], [0]>} : vector<2x8x8xf32>, vector<2x8x32xf32>, vector<2x8x32xf32> -> vector<2x8x32xf32>
    "tpu.trace_stop"() : () -> ()
    %71 = vector.extract_strided_slice %13 {offsets = [64, 0], sizes = [32, 128], strides = [1, 1]} : vector<128x128xf32> to vector<32x128xf32>
    %72 = vector.shape_cast %70 : vector<2x8x32xf32> to vector<16x32xf32>
    %cst_33 = arith.constant dense<0.000000e+00> : vector<16x128xf32>
    %73 = tpu.matmul %72, %71, %cst_33 {dimension_numbers = #tpu.dot_dimension_numbers<[1], [0], [0], [1], [0, 0, 1, 1], [], []>} : vector<16x32xf32>, vector<32x128xf32>, vector<16x128xf32> -> vector<16x128xf32>
    %74 = arith.addf %54, %73 : vector<16x128xf32>
    %75 = vector.extract_strided_slice %6 {offsets = [0, 0, 96], sizes = [2, 8, 32], strides = [1, 1, 1]} : vector<2x8x128xf32> to vector<2x8x32xf32>
    %76 = vector.extract_strided_slice %9 {offsets = [0, 0, 96], sizes = [2, 8, 32], strides = [1, 1, 1]} : vector<2x8x128xf32> to vector<2x8x32xf32>
    %77 = vector.extract_strided_slice %12 {offsets = [0, 0, 96], sizes = [2, 8, 32], strides = [1, 1, 1]} : vector<2x8x128xf32> to vector<2x8x32xf32>
    "tpu.trace_start"() <{level = 10 : i32, message = "bqd,bkd->bqk"}> : () -> ()
    %cst_34 = arith.constant dense<0.000000e+00> : vector<2x8x8xf32>
    %78 = tpu.matmul %75, %76, %cst_34 {dimension_numbers = #tpu.dot_dimension_numbers<[2], [2], [1], [1], [0, 0, 0, 1, 1, 1], [0], [0]>} : vector<2x8x32xf32>, vector<2x8x32xf32>, vector<2x8x8xf32> -> vector<2x8x8xf32>
    "tpu.trace_stop"() : () -> ()
    %cst_35 = arith.constant 0.176776692 : f32
    %79 = vector.broadcast %cst_35 : f32 to vector<2x8x8xf32>
    %80 = arith.mulf %78, %79 : vector<2x8x8xf32>
    %cst_36 = arith.constant dense<0xFF800000> : vector<2x8xf32>
    %81 = vector.multi_reduction <maximumf>, %80, %cst_36 [2] : vector<2x8x8xf32> to vector<2x8xf32>
    %82 = vector.shape_cast %81 : vector<2x8xf32> to vector<2x8x1xf32>
    %83 = vector.broadcast %82 : vector<2x8x1xf32> to vector<2x8x8xf32>
    %84 = arith.subf %80, %83 : vector<2x8x8xf32>
    %85 = math.exp %84 : vector<2x8x8xf32>
    %cst_37 = arith.constant dense<0.000000e+00> : vector<2x8xf32>
    %86 = vector.multi_reduction <add>, %85, %cst_37 [2] : vector<2x8x8xf32> to vector<2x8xf32>
    %87 = vector.shape_cast %86 : vector<2x8xf32> to vector<2x8x1xf32>
    %88 = vector.broadcast %87 : vector<2x8x1xf32> to vector<2x8x8xf32>
    %89 = arith.divf %85, %88 : vector<2x8x8xf32>
    "tpu.trace_start"() <{level = 10 : i32, message = "bqk,bkd->bqd"}> : () -> ()
    %cst_38 = arith.constant dense<0.000000e+00> : vector<2x8x32xf32>
    %90 = tpu.matmul %89, %77, %cst_38 {dimension_numbers = #tpu.dot_dimension_numbers<[2], [1], [1], [2], [0, 0, 0, 1, 1, 2], [0], [0]>} : vector<2x8x8xf32>, vector<2x8x32xf32>, vector<2x8x32xf32> -> vector<2x8x32xf32>
    "tpu.trace_stop"() : () -> ()
    %91 = vector.extract_strided_slice %13 {offsets = [96, 0], sizes = [32, 128], strides = [1, 1]} : vector<128x128xf32> to vector<32x128xf32>
    %92 = vector.shape_cast %90 : vector<2x8x32xf32> to vector<16x32xf32>
    %cst_39 = arith.constant dense<0.000000e+00> : vector<16x128xf32>
    %93 = tpu.matmul %92, %91, %cst_39 {dimension_numbers = #tpu.dot_dimension_numbers<[1], [0], [0], [1], [0, 0, 1, 1], [], []>} : vector<16x32xf32>, vector<32x128xf32>, vector<16x128xf32> -> vector<16x128xf32>
    %94 = arith.addf %74, %93 : vector<16x128xf32>
    %95 = vector.shape_cast %94 : vector<16x128xf32> to vector<2x8x128xf32>
    %c0_40 = arith.constant 0 : index
    %c0_41 = arith.constant 0 : index
    %c0_42 = arith.constant 0 : index
    %96 = vector.load %arg7[%c0_40, %c0_41, %c0_42] : memref<2x8x128xf32, #tpu.memory_space<vmem>>, vector<2x8x128xf32>
    tpu.vector_store %arg7[%c0_40, %c0_41, %c0_42], %95 {strides = array<i32>} : memref<2x8x128xf32, #tpu.memory_space<vmem>>, vector<2x8x128xf32>,
    return
  }
  func.func @transform_0(%arg0: i32) -> (i32, i32, i32) {
    %c0_i32 = arith.constant 0 : i32
    %c0_i32_0 = arith.constant 0 : i32
    %c0_i32_1 = arith.constant 0 : i32
    return %arg0, %c0_i32, %c0_i32_0 : i32, i32, i32
  }
  func.func @transform_1(%arg0: i32) -> (i32, i32, i32) {
    %c0_i32 = arith.constant 0 : i32
    %c0_i32_0 = arith.constant 0 : i32
    %c0_i32_1 = arith.constant 0 : i32
    return %arg0, %c0_i32, %c0_i32_0 : i32, i32, i32
  }
  func.func @transform_2(%arg0: i32) -> (i32, i32) {
    %c0_i32 = arith.constant 0 : i32
    %c0_i32_0 = arith.constant 0 : i32
    %c0_i32_1 = arith.constant 0 : i32
    return %c0_i32, %c0_i32_0 : i32, i32
  }
  func.func @transform_3(%arg0: i32) -> (i32, i32) {
    %c0_i32 = arith.constant 0 : i32
    %c0_i32_0 = arith.constant 0 : i32
    %c0_i32_1 = arith.constant 0 : i32
    return %c0_i32, %c0_i32_0 : i32, i32
  }
  func.func @transform_4(%arg0: i32) -> (i32, i32) {
    %c0_i32 = arith.constant 0 : i32
    %c0_i32_0 = arith.constant 0 : i32
    %c0_i32_1 = arith.constant 0 : i32
    return %c0_i32, %c0_i32_0 : i32, i32
  }
  func.func @transform_5(%arg0: i32) -> (i32, i32) {
    %c0_i32 = arith.constant 0 : i32
    %c0_i32_0 = arith.constant 0 : i32
    %c0_i32_1 = arith.constant 0 : i32
    return %c0_i32, %c0_i32_0 : i32, i32
  }
  func.func @transform_6(%arg0: i32) -> (i32, i32, i32) {
    %c0_i32 = arith.constant 0 : i32
    %c0_i32_0 = arith.constant 0 : i32
    %c0_i32_1 = arith.constant 0 : i32
    return %arg0, %c0_i32, %c0_i32_0 : i32, i32, i32
  }
}

</mosaic_0001>

<llo_original>
// kernel: tpu_custom_call.1
$region0: #{tpu_custom_call.1}
  #allocation0 [shape = 'u32[]', space=smem, size = 0x4, offset = 0x4, fixed_abs, tag = 'smem constant byte address 0x4 - core index']
  #allocation1 [shape = 'u32[72,128]{1,0:T(1,128)}', space=vmem, size = 0x9000, scoped, tag = 'internal scratch']
  %s0 = inlined_call_operand.hbm [shape: f32[8,8,32], index: 0, kind: input, shape index: {}]
  %s1 = inlined_call_operand.hbm [shape: f32[8,8,32], index: 1, kind: input, shape index: {}]
  %s2 = inlined_call_operand.hbm [shape: f32[32,128], index: 2, kind: input, shape index: {}]
  %s3 = inlined_call_operand.hbm [shape: f32[32,128], index: 3, kind: input, shape index: {}]
  %s4 = inlined_call_operand.hbm [shape: f32[32,128], index: 4, kind: input, shape index: {}]
  %s5 = inlined_call_operand.hbm [shape: f32[128,128], index: 5, kind: input, shape index: {}]
  %s6 = inlined_call_operand.hbm [shape: f32[8,8,128], index: 6, kind: output, shape index: {}]
  %s7 = sld [smem:[#allocation0]]
  $region81: #{tpu_custom_call.1} parent=0
    _
  %s9 = ssub.s32 1, %s7
  %s10 = scalar_select 0, %s9, %s7
  $region1: #{tpu_custom_call.1} parent=0
    #allocation2 [shape = 'u8[16384]{0}', space=vmem, size = 0x4000, scoped, tag = 'input window, operand 0']
    #allocation3 [shape = 's32[2]{0}', space=sflag, size = 0x8, scoped, tag = 'scoped memory for tpu_custom_call.1']
    #allocation4 [shape = 's32[2]{0}', space=sflag, size = 0x8, scoped, tag = 'scoped memory for tpu_custom_call.1']
    #allocation5 [shape = 'u8[16384]{0}', space=vmem, size = 0x4000, scoped, tag = 'input window, operand 1']
    #allocation6 [shape = 's32[2]{0}', space=sflag, size = 0x8, scoped, tag = 'scoped memory for tpu_custom_call.1']
    #allocation7 [shape = 'u8[16384]{0}', space=vmem, size = 0x4000, scoped, tag = 'input window, operand 2, single buffered']
    #allocation8 [shape = 'u8[16384]{0}', space=vmem, size = 0x4000, scoped, tag = 'input window, operand 3, single buffered']
    #allocation9 [shape = 's32[1]{0}', space=sflag, size = 0x4, scoped, tag = 'scoped memory for tpu_custom_call.1']
    #allocation10 [shape = 'u8[16384]{0}', space=vmem, size = 0x4000, scoped, tag = 'input window, operand 4, single buffered']
    #allocation11 [shape = 'u8[65536]{0}', space=vmem, size = 0x10000, scoped, tag = 'input window, operand 5, single buffered']
    #allocation12 [shape = 's32[1]{0}', space=sflag, size = 0x4, scoped, tag = 'scoped memory for tpu_custom_call.1']
    #allocation13 [shape = 'u8[16384]{0}', space=vmem, size = 0x4000, scoped, tag = 'output window, operand 0']
    %11 = vsyncpa [#allocation3], 0
    %s12 = scalar_lea.sflag [#allocation3], 1
    %13 = vsyncpa %s12, 0
    %14 = vsyncpa [#allocation6], 0
    %s15 = scalar_lea.sflag [#allocation6], 1
    %16 = vsyncpa %s15, 0
    %17 = vsyncpa [#allocation9], 0
    %18 = vsyncpa [#allocation12], 0
    %19 = vsyncpa [#allocation4], 0
    %s20 = scalar_lea.sflag [#allocation4], 1
    %21 = vsyncpa %s20, 0
    loop: start=0, step=1, limit=6
    $region2: #{tpu_custom_call.1} parent=1 // loop_pre_header
      _
    $region3: #{tpu_custom_call.1} parent=1 // loop_header
      %s23 = sphi 0, %s27
      %p24 = scmp.ge.s32.totalorder %s23, 6
      %s33 = sphi 0, %s35
      %s36 = sphi 0, %s33
      %s37 = sphi 0, %s36
      %s53 = sphi 0, %s37
      %s59 = sphi 0, %s61
      %s62 = sphi 0, %s59
      %s63 = sphi 0, %s62
      %s79 = sphi 0, %s63
      %s83 = sphi 0, %s83
      %s85 = sphi 0, %s83
      %s86 = sphi 0, %s85
      %s100 = sphi 0, %s86
      %s104 = sphi 0, %s104
      %s106 = sphi 0, %s104
      %s107 = sphi 0, %s106
      %s121 = sphi 0, %s107
      %s125 = sphi 0, %s125
      %s127 = sphi 0, %s125
      %s128 = sphi 0, %s127
      %s142 = sphi 0, %s128
      %s146 = sphi 0, %s146
      %s148 = sphi 0, %s146
      %s149 = sphi 0, %s148
      %s163 = sphi 0, %s149
      %s169 = sphi 0, %s171
      %s172 = sphi 0, %s169
      %s173 = sphi 0, %s172
      %s189 = sphi 0, %s173
    $region4: #{tpu_custom_call.1} parent=1 // loop_header_branch
      %26 = sbr.rel (%p24) target = $region8
    $region5: #{tpu_custom_call.1} parent=1 // loop_body
      %s28 = ssub.s32 %s23, 1
      %s29 = ssub.s32 %s23, 2
      %s30 = sadd.s32 %s23, 1
      %s31 = ssub.s32 %s23, %s30
      %p32 = scmp.eq.s32.totalorder %s31, 0
      %s34 = sadd.s32 %s33, 1
      %s35 = scalar_select %p32, %s33, %s34
      %p38 = pneg %p32
      %p39 = scmp.eq.s32.totalorder %s23, 3
      %p40 = por %p38, %p39
      %p41 = scmp.ne.s32.totalorder %s33, %s36
      %p42 = scmp.eq.s32.totalorder %s23, 0
      %p43 = por %p41, %p42
      %p44 = scmp.ne.s32.totalorder %s33, %s36
      %p45 = scmp.eq.s32.totalorder %s28, 3
      %p46 = por %p44, %p45
      %p47 = scmp.ne.s32.totalorder %s36, %s37
      %p48 = scmp.eq.s32.totalorder %s28, 0
      %p49 = por %p47, %p48
      %p50 = scmp.ne.s32.totalorder %s36, %s37
      %p51 = scmp.eq.s32.totalorder %s29, 3
      %p52 = por %p50, %p51
      %p54 = scmp.ne.s32.totalorder %s37, %s53
      %p55 = scmp.eq.s32.totalorder %s29, 0
      %p56 = por %p54, %p55
      %s57 = ssub.s32 %s23, %s30
      %p58 = scmp.eq.s32.totalorder %s57, 0
      %s60 = sadd.s32 %s59, 1
      %s61 = scalar_select %p58, %s59, %s60
      %p64 = pneg %p58
      %p65 = scmp.eq.s32.totalorder %s23, 3
      %p66 = por %p64, %p65
      %p67 = scmp.ne.s32.totalorder %s59, %s62
      %p68 = scmp.eq.s32.totalorder %s23, 0
      %p69 = por %p67, %p68
      %p70 = scmp.ne.s32.totalorder %s59, %s62
      %p71 = scmp.eq.s32.totalorder %s28, 3
      %p72 = por %p70, %p71
      %p73 = scmp.ne.s32.totalorder %s62, %s63
      %p74 = scmp.eq.s32.totalorder %s28, 0
      %p75 = por %p73, %p74
      %p76 = scmp.ne.s32.totalorder %s62, %s63
      %p77 = scmp.eq.s32.totalorder %s29, 3
      %p78 = por %p76, %p77
      %p80 = scmp.ne.s32.totalorder %s63, %s79
      %p81 = scmp.eq.s32.totalorder %s29, 0
      %p82 = por %p80, %p81
      %s84 = sadd.s32 %s83, 1
      %p87 = scmp.eq.s32.totalorder %s23, 3
      %p88 = scmp.ne.s32.totalorder %s83, %s85
      %p89 = scmp.eq.s32.totalorder %s23, 0
      %p90 = por %p88, %p89
      %p91 = scmp.ne.s32.totalorder %s83, %s85
      %p92 = scmp.eq.s32.totalorder %s28, 3
      %p93 = por %p91, %p92
      %p94 = scmp.ne.s32.totalorder %s85, %s86
      %p95 = scmp.eq.s32.totalorder %s28, 0
      %p96 = por %p94, %p95
      %p97 = scmp.ne.s32.totalorder %s85, %s86
      %p98 = scmp.eq.s32.totalorder %s29, 3
      %p99 = por %p97, %p98
      %p101 = scmp.ne.s32.totalorder %s86, %s100
      %p102 = scmp.eq.s32.totalorder %s29, 0
      %p103 = por %p101, %p102
      %s105 = sadd.s32 %s104, 1
      %p108 = scmp.eq.s32.totalorder %s23, 3
      %p109 = scmp.ne.s32.totalorder %s104, %s106
      %p110 = scmp.eq.s32.totalorder %s23, 0
      %p111 = por %p109, %p110
      %p112 = scmp.ne.s32.totalorder %s104, %s106
      %p113 = scmp.eq.s32.totalorder %s28, 3
      %p114 = por %p112, %p113
      %p115 = scmp.ne.s32.totalorder %s106, %s107
      %p116 = scmp.eq.s32.totalorder %s28, 0
      %p117 = por %p115, %p116
      %p118 = scmp.ne.s32.totalorder %s106, %s107
      %p119 = scmp.eq.s32.totalorder %s29, 3
      %p120 = por %p118, %p119
      %p122 = scmp.ne.s32.totalorder %s107, %s121
      %p123 = scmp.eq.s32.totalorder %s29, 0
      %p124 = por %p122, %p123
      %s126 = sadd.s32 %s125, 1
      %p129 = scmp.eq.s32.totalorder %s23, 3
      %p130 = scmp.ne.s32.totalorder %s125, %s127
      %p131 = scmp.eq.s32.totalorder %s23, 0
      %p132 = por %p130, %p131
      %p133 = scmp.ne.s32.totalorder %s125, %s127
      %p134 = scmp.eq.s32.totalorder %s28, 3
      %p135 = por %p133, %p134
      %p136 = scmp.ne.s32.totalorder %s127, %s128
      %p137 = scmp.eq.s32.totalorder %s28, 0
      %p138 = por %p136, %p137
      %p139 = scmp.ne.s32.totalorder %s127, %s128
      %p140 = scmp.eq.s32.totalorder %s29, 3
      %p141 = por %p139, %p140
      %p143 = scmp.ne.s32.totalorder %s128, %s142
      %p144 = scmp.eq.s32.totalorder %s29, 0
      %p145 = por %p143, %p144
      %s147 = sadd.s32 %s146, 1
      %p150 = scmp.eq.s32.totalorder %s23, 3
      %p151 = scmp.ne.s32.totalorder %s146, %s148
      %p152 = scmp.eq.s32.totalorder %s23, 0
      %p153 = por %p151, %p152
      %p154 = scmp.ne.s32.totalorder %s146, %s148
      %p155 = scmp.eq.s32.totalorder %s28, 3
      %p156 = por %p154, %p155
      %p157 = scmp.ne.s32.totalorder %s148, %s149
      %p158 = scmp.eq.s32.totalorder %s28, 0
      %p159 = por %p157, %p158
      %p160 = scmp.ne.s32.totalorder %s148, %s149
      %p161 = scmp.eq.s32.totalorder %s29, 3
      %p162 = por %p160, %p161
      %p164 = scmp.ne.s32.totalorder %s149, %s163
      %p165 = scmp.eq.s32.totalorder %s29, 0
      %p166 = por %p164, %p165
      %s167 = ssub.s32 %s23, %s30
      %p168 = scmp.eq.s32.totalorder %s167, 0
      %s170 = sadd.s32 %s169, 1
      %s171 = scalar_select %p168, %s169, %s170
      %p174 = pneg %p168
      %p175 = scmp.eq.s32.totalorder %s23, 3
      %p176 = por %p174, %p175
      %p177 = scmp.ne.s32.totalorder %s169, %s172
      %p178 = scmp.eq.s32.totalorder %s23, 0
      %p179 = por %p177, %p178
      %p180 = scmp.ne.s32.totalorder %s169, %s172
      %p181 = scmp.eq.s32.totalorder %s28, 3
      %p182 = por %p180, %p181
      %p183 = scmp.ne.s32.totalorder %s172, %s173
      %p184 = scmp.eq.s32.totalorder %s28, 0
      %p185 = por %p183, %p184
      %p186 = scmp.ne.s32.totalorder %s172, %s173
      %p187 = scmp.eq.s32.totalorder %s29, 3
      %p188 = por %p186, %p187
      %p190 = scmp.ne.s32.totalorder %s173, %s189
      %p191 = scmp.eq.s32.totalorder %s29, 0
      %p192 = por %p190, %p191
      %p193 = scmp.le.s32.totalorder 1, %s23
      %p194 = scmp.lt.s32.totalorder %s23, 5
      %p195 = pnand %p193, %p194
      %p196 = pneg %p195
      // Predicated region
      $region9: #{tpu_custom_call.1} parent=5 // pred_check
        _
      $region10: #{tpu_custom_call.1} parent=5 // pred_check_branch
        %198 = sbr.rel (%p195) target = $region12
      $region11: #{tpu_custom_call.1} parent=5 // pred_region
        %s199 = ssub.s32 %s23, 1
        // Predicated region
        $region13: #{tpu_custom_call.1} parent=11 // pred_check
          %p200 = pneg %p96
        $region14: #{tpu_custom_call.1} parent=11 // pred_check_branch
          %202 = sbr.rel (%p200) target = $region16
        $region15: #{tpu_custom_call.1} parent=11 // pred_region
          %204 = vsyncadd [#allocation6], 0
          %s205 = sshll.u32 %s2, 4
          %s206 = int_to_ptr.hbm [resolvable:$true] %s205
          %s207 = sshll.u32 [#allocation7], 4
          %s208 = int_to_ptr.vmem [resolvable:$true] %s207
          %213 = dma.hbm_to_vmem [thread:$0]  %s206, 512, %s208, [#allocation6], 128, 128, 8
        $region16: #{tpu_custom_call.1} parent=11 // pred_fallthru
          _
        // Predicated region
        $region17: #{tpu_custom_call.1} parent=11 // pred_check
          %p214 = pneg %p117
        $region18: #{tpu_custom_call.1} parent=11 // pred_check_branch
          %216 = sbr.rel (%p214) target = $region20
        $region19: #{tpu_custom_call.1} parent=11 // pred_region
          %218 = vsyncadd [#allocation9], 0
          %s219 = sshll.u32 %s3, 4
          %s220 = int_to_ptr.hbm [resolvable:$true] %s219
          %s221 = sshll.u32 [#allocation8], 4
          %s222 = int_to_ptr.vmem [resolvable:$true] %s221
          %227 = dma.hbm_to_vmem [thread:$0]  %s220, 512, %s222, [#allocation9], 128, 128, 8
        $region20: #{tpu_custom_call.1} parent=11 // pred_fallthru
          _
        // Predicated region
        $region21: #{tpu_custom_call.1} parent=11 // pred_check
          %p228 = pneg %p138
        $region22: #{tpu_custom_call.1} parent=11 // pred_check_branch
          %230 = sbr.rel (%p228) target = $region24
        $region23: #{tpu_custom_call.1} parent=11 // pred_region
          %232 = vsyncadd [#allocation9], 0
          %s233 = sshll.u32 %s4, 4
          %s234 = int_to_ptr.hbm [resolvable:$true] %s233
          %s235 = sshll.u32 [#allocation10], 4
          %s236 = int_to_ptr.vmem [resolvable:$true] %s235
          %241 = dma.hbm_to_vmem [thread:$0]  %s234, 512, %s236, [#allocation9], 128, 128, 8
        $region24: #{tpu_custom_call.1} parent=11 // pred_fallthru
          _
        // Predicated region
        $region25: #{tpu_custom_call.1} parent=11 // pred_check
          %p242 = pneg %p159
        $region26: #{tpu_custom_call.1} parent=11 // pred_check_branch
          %244 = sbr.rel (%p242) target = $region28
        $region27: #{tpu_custom_call.1} parent=11 // pred_region
          %246 = vsyncadd [#allocation12], 0
          %s247 = sshll.u32 %s5, 4
          %s248 = int_to_ptr.hbm [resolvable:$true] %s247
          %s249 = sshll.u32 [#allocation11], 4
          %s250 = int_to_ptr.vmem [resolvable:$true] %s249
          %255 = dma.hbm_to_vmem [thread:$0]  %s248, 2048, %s250, [#allocation12], 128, 128, 8
        $region28: #{tpu_custom_call.1} parent=11 // pred_fallthru
          _
      $region12: #{tpu_custom_call.1} parent=5 // pred_fallthru
        _
      %p256 = scmp.lt.s32.totalorder %s23, 4
      // Predicated region
      $region29: #{tpu_custom_call.1} parent=5 // pred_check
        %p257 = pneg %p256
      $region30: #{tpu_custom_call.1} parent=5 // pred_check_branch
        %259 = sbr.rel (%p257) target = $region32
      $region31: #{tpu_custom_call.1} parent=5 // pred_region
        // Predicated region
        $region33: #{tpu_custom_call.1} parent=31 // pred_check
          %p260 = pneg %p43
        $region34: #{tpu_custom_call.1} parent=31 // pred_check_branch
          %262 = sbr.rel (%p260) target = $region36
        $region35: #{tpu_custom_call.1} parent=31 // pred_region
          %s263 = sand.u32 %s33, 1
          %s264 = scalar_lea.sflag [#allocation3], %s263
          %s265 = sand.u32 %s33, 1
          %s266 = smul.addr %s265, 16
          %s267 = scalar_lea.vmem [#allocation2], %s266
          %s268 = smul.u32 2, %s23
          %270 = vsyncadd %s264, 0
          %s271 = smul.addr %s268, 8
          %s272 = scalar_lea.hbm %s0, %s271
          %s273 = sshll.u32 %s272, 4
          %s274 = int_to_ptr.hbm [resolvable:$true] %s273
          %s275 = sshll.u32 %s267, 4
          %s276 = int_to_ptr.vmem [resolvable:$true] %s275
          %281 = dma.hbm_to_vmem [thread:$0]  %s274, 256, %s276, %s264, 128, 128, 8
        $region36: #{tpu_custom_call.1} parent=31 // pred_fallthru
          _
        // Predicated region
        $region37: #{tpu_custom_call.1} parent=31 // pred_check
          %p282 = pneg %p69
        $region38: #{tpu_custom_call.1} parent=31 // pred_check_branch
          %284 = sbr.rel (%p282) target = $region40
        $region39: #{tpu_custom_call.1} parent=31 // pred_region
          %s285 = sand.u32 %s23, 1
          %s286 = scalar_lea.sflag [#allocation6], %s285
          %s287 = sand.u32 %s59, 1
          %s288 = smul.addr %s287, 16
          %s289 = scalar_lea.vmem [#allocation5], %s288
          %s290 = smul.u32 2, %s23
          %292 = vsyncadd %s286, 0
          %s293 = smul.addr %s290, 8
          %s294 = scalar_lea.hbm %s1, %s293
          %s295 = sshll.u32 %s294, 4
          %s296 = int_to_ptr.hbm [resolvable:$true] %s295
          %s297 = sshll.u32 %s289, 4
          %s298 = int_to_ptr.vmem [resolvable:$true] %s297
          %303 = dma.hbm_to_vmem [thread:$0]  %s296, 256, %s298, %s286, 128, 128, 8
        $region40: #{tpu_custom_call.1} parent=31 // pred_fallthru
          _
      $region32: #{tpu_custom_call.1} parent=5 // pred_fallthru
        _
      %p304 = scmp.le.s32.totalorder 1, %s23
      %p305 = scmp.lt.s32.totalorder %s23, 5
      %p306 = pnand %p304, %p305
      %p307 = pneg %p306
      // Predicated region
      $region41: #{tpu_custom_call.1} parent=5 // pred_check
        _
      $region42: #{tpu_custom_call.1} parent=5 // pred_check_branch
        %309 = sbr.rel (%p306) target = $region44
      $region43: #{tpu_custom_call.1} parent=5 // pred_region
        %s310 = ssub.s32 %s23, 1
        %s311 = sand.u32 %s36, 1
        %s312 = scalar_lea.sflag [#allocation3], %s311
        %s313 = sand.u32 %s36, 1
        %s314 = smul.addr %s313, 16
        %s315 = scalar_lea.vmem [#allocation2], %s314
        // Predicated region
        $region45: #{tpu_custom_call.1} parent=43 // pred_check
          %p316 = pneg %p49
        $region46: #{tpu_custom_call.1} parent=43 // pred_check_branch
          %318 = sbr.rel (%p316) target = $region48
        $region47: #{tpu_custom_call.1} parent=43 // pred_region
          %320 = dma.done %s312, 256
        $region48: #{tpu_custom_call.1} parent=43 // pred_fallthru
          _
        %s321 = sand.u32 %s28, 1
        %s322 = scalar_lea.sflag [#allocation6], %s321
        %s323 = sand.u32 %s62, 1
        %s324 = smul.addr %s323, 16
        %s325 = scalar_lea.vmem [#allocation5], %s324
        // Predicated region
        $region49: #{tpu_custom_call.1} parent=43 // pred_check
          %p326 = pneg %p75
        $region50: #{tpu_custom_call.1} parent=43 // pred_check_branch
          %328 = sbr.rel (%p326) target = $region52
        $region51: #{tpu_custom_call.1} parent=43 // pred_region
          %330 = dma.done %s322, 256
        $region52: #{tpu_custom_call.1} parent=43 // pred_fallthru
          _
        // Predicated region
        $region53: #{tpu_custom_call.1} parent=43 // pred_check
          %p331 = pneg %p96
        $region54: #{tpu_custom_call.1} parent=43 // pred_check_branch
          %333 = sbr.rel (%p331) target = $region56
        $region55: #{tpu_custom_call.1} parent=43 // pred_region
          %335 = dma.done [#allocation6], 512
        $region56: #{tpu_custom_call.1} parent=43 // pred_fallthru
          _
        // Predicated region
        $region57: #{tpu_custom_call.1} parent=43 // pred_check
          %p336 = pneg %p117
        $region58: #{tpu_custom_call.1} parent=43 // pred_check_branch
          %338 = sbr.rel (%p336) target = $region60
        $region59: #{tpu_custom_call.1} parent=43 // pred_region
          %340 = dma.done [#allocation9], 512
        $region60: #{tpu_custom_call.1} parent=43 // pred_fallthru
          _
        // Predicated region
        $region61: #{tpu_custom_call.1} parent=43 // pred_check
          %p341 = pneg %p138
        $region62: #{tpu_custom_call.1} parent=43 // pred_check_branch
          %343 = sbr.rel (%p341) target = $region64
        $region63: #{tpu_custom_call.1} parent=43 // pred_region
          %345 = dma.done [#allocation9], 512
        $region64: #{tpu_custom_call.1} parent=43 // pred_fallthru
          _
        // Predicated region
        $region65: #{tpu_custom_call.1} parent=43 // pred_check
          %p346 = pneg %p159
        $region66: #{tpu_custom_call.1} parent=43 // pred_check_branch
          %348 = sbr.rel (%p346) target = $region68
        $region67: #{tpu_custom_call.1} parent=43 // pred_region
          %350 = dma.done [#allocation12], 2048
        $region68: #{tpu_custom_call.1} parent=43 // pred_fallthru
          _
        %s351 = sand.u32 %s36, 1
        %s352 = scalar_lea.sflag [#allocation3], %s351
        %s353 = sand.u32 %s36, 1
        %s354 = smul.addr %s353, 16
        %s355 = scalar_lea.vmem [#allocation2], %s354
        %p356 = pneg %p49
        %p357 = pneg %p46
        %s358 = sand.u32 %s28, 1
        %s359 = scalar_lea.sflag [#allocation6], %s358
        %s360 = sand.u32 %s62, 1
        %s361 = smul.addr %s360, 16
        %s362 = scalar_lea.vmem [#allocation5], %s361
        %p363 = pneg %p75
        %p364 = pneg %p72
        %p365 = pneg %p96
        %p366 = pneg %p93
        %p367 = pneg %p117
        %p368 = pneg %p114
        %p369 = pneg %p138
        %p370 = pneg %p135
        %p371 = pneg %p159
        %p372 = pneg %p156
        %p373 = pneg %p185
        %p374 = pneg %p182
        %s375 = sand.u32 %s172, 1
        %s376 = scalar_lea.sflag [#allocation4], %s375
        %s377 = sand.u32 %s172, 1
        %s378 = smul.addr %s377, 16
        %s379 = scalar_lea.vmem [#allocation13], %s378
        %s380 = smul.u32 2, %s28
        %s381 = smul.u32 2, %s28
        %s382 = smul.u32 2, %s28
        %v383 = vld [vmem:[%s315] sm:$0xff]
        %v384 = vld [vmem:[%s315 + $0x8] sm:$0xff]
        %v385 = vld [vmem:[%s325] sm:$0xff]
        %v386 = vld [vmem:[%s325 + $0x8] sm:$0xff]
        %v387 = vld [vmem:[#allocation7] sm:$0xff]
        %v388 = vld [vmem:[#allocation7 + $0x8] sm:$0xff]
        %v389 = vld [vmem:[#allocation7 + $0x10] sm:$0xff]
        %v390 = vld [vmem:[#allocation7 + $0x18] sm:$0xff]
        %vm391 = vcmask 261120
        %v393 = vsel %vm391, %v383, 0
        %v396 = vsel %vm391, %v384, 0
        %398 = vmatpush.msra.mxu0 0.0
        %399 = vmatpush.msra.mxu0 0.0
        %400 = vmatpush.msra.mxu0 0.0
        %401 = vmatpush.msra.mxu0 0.0
        %402 = vmatpush.msra.mxu0 0.0
        %403 = vmatpush.msra.mxu0 0.0
        %404 = vmatpush.msra.mxu0 0.0
        %405 = vmatpush.msra.mxu0 0.0
        %406 = vmatpush.msra.mxu0 0.0
        %407 = vmatpush.msra.mxu0 0.0
        %408 = vmatpush.msra.mxu0 0.0
        %409 = vmatpush.msra.mxu0 0.0
        %410 = vmatpush.msra.mxu0 %v390
        %411 = vmatpush.msra.mxu0 %v389
        %412 = vmatpush.msra.mxu0 %v388
        %413 = vmatpush.msra.mxu0 %v387
        %414 = vmatmul.f32.gmra.mxu0 %v393
        %v415 = vpop.f32.mrf.mxu0
        %v416 = vadd.f32 0.0, %v415
        %417 = vmatmul.f32.gmra.mxu0 %v396
        %v418 = vpop.f32.mrf.mxu0
        %v419 = vadd.f32 0.0, %v418
        %420 = vdwg.mxu0
        %v421 = vld [vmem:[#allocation8] sm:$0xff]
        %v422 = vld [vmem:[#allocation8 + $0x8] sm:$0xff]
        %v423 = vld [vmem:[#allocation8 + $0x10] sm:$0xff]
        %v424 = vld [vmem:[#allocation8 + $0x18] sm:$0xff]
        %v426 = vsel %vm391, %v385, 0
        %v429 = vsel %vm391, %v386, 0
        %431 = vmatpush.msra.mxu0 0.0
        %432 = vmatpush.msra.mxu0 0.0
        %433 = vmatpush.msra.mxu0 0.0
        %434 = vmatpush.msra.mxu0 0.0
        %435 = vmatpush.msra.mxu0 0.0
        %436 = vmatpush.msra.mxu0 0.0
        %437 = vmatpush.msra.mxu0 0.0
        %438 = vmatpush.msra.mxu0 0.0
        %439 = vmatpush.msra.mxu0 0.0
        %440 = vmatpush.msra.mxu0 0.0
        %441 = vmatpush.msra.mxu0 0.0
        %442 = vmatpush.msra.mxu0 0.0
        %443 = vmatpush.msra.mxu0 %v424
        %444 = vmatpush.msra.mxu0 %v423
        %445 = vmatpush.msra.mxu0 %v422
        %446 = vmatpush.msra.mxu0 %v421
        %447 = vmatmul.f32.gmra.mxu0 %v426
        %v448 = vpop.f32.mrf.mxu0
        %v449 = vadd.f32 0.0, %v448
        %450 = vmatmul.f32.gmra.mxu0 %v429
        %v451 = vpop.f32.mrf.mxu0
        %v452 = vadd.f32 0.0, %v451
        %453 = vdwg.mxu0
        %v454 = vld [vmem:[#allocation10] sm:$0xff]
        %v455 = vld [vmem:[#allocation10 + $0x8] sm:$0xff]
        %v456 = vld [vmem:[#allocation10 + $0x10] sm:$0xff]
        %v457 = vld [vmem:[#allocation10 + $0x18] sm:$0xff]
        %458 = vmatpush.msra.mxu0 0.0
        %459 = vmatpush.msra.mxu0 0.0
        %460 = vmatpush.msra.mxu0 0.0
        %461 = vmatpush.msra.mxu0 0.0
        %462 = vmatpush.msra.mxu0 0.0
        %463 = vmatpush.msra.mxu0 0.0
        %464 = vmatpush.msra.mxu0 0.0
        %465 = vmatpush.msra.mxu0 0.0
        %466 = vmatpush.msra.mxu0 0.0
        %467 = vmatpush.msra.mxu0 0.0
        %468 = vmatpush.msra.mxu0 0.0
        %469 = vmatpush.msra.mxu0 0.0
        %470 = vmatpush.msra.mxu0 %v457
        %471 = vmatpush.msra.mxu0 %v456
        %472 = vmatpush.msra.mxu0 %v455
        %473 = vmatpush.msra.mxu0 %v454
        %474 = vmatmul.f32.gmra.mxu0 %v426
        %v475 = vpop.f32.mrf.mxu0
        %v476 = vadd.f32 0.0, %v475
        %477 = vmatmul.f32.gmra.mxu0 %v429
        %v478 = vpop.f32.mrf.mxu0
        %v479 = vadd.f32 0.0, %v478
        %480 = vdwg.mxu0
        %v481 = vld [vmem:[#allocation11] sm:$0xff]
        %v482 = vld [vmem:[#allocation11 + $0x8] sm:$0xff]
        %v483 = vld [vmem:[#allocation11 + $0x10] sm:$0xff]
        %v484 = vld [vmem:[#allocation11 + $0x18] sm:$0xff]
        %v485 = vld [vmem:[#allocation11 + $0x20] sm:$0xff]
        %v486 = vld [vmem:[#allocation11 + $0x28] sm:$0xff]
        %v487 = vld [vmem:[#allocation11 + $0x30] sm:$0xff]
        %v488 = vld [vmem:[#allocation11 + $0x38] sm:$0xff]
        %v489 = vld [vmem:[#allocation11 + $0x40] sm:$0xff]
        %v490 = vld [vmem:[#allocation11 + $0x48] sm:$0xff]
        %v491 = vld [vmem:[#allocation11 + $0x50] sm:$0xff]
        %v492 = vld [vmem:[#allocation11 + $0x58] sm:$0xff]
        %v493 = vld [vmem:[#allocation11 + $0x60] sm:$0xff]
        %v494 = vld [vmem:[#allocation11 + $0x68] sm:$0xff]
        %v495 = vld [vmem:[#allocation11 + $0x70] sm:$0xff]
        %v496 = vld [vmem:[#allocation11 + $0x78] sm:$0xff]
        %v498 = vsel %vm391, %v416, 0
        %v501 = vsel %vm391, %v449, 0
        %503 = vmatpush.xpose.msra.mxu0 0.0
        %504 = vmatpush.xpose.msra.mxu0 0.0
        %505 = vmatpush.xpose.msra.mxu0 0.0
        %506 = vmatpush.xpose.msra.mxu0 0.0
        %507 = vmatpush.xpose.msra.mxu0 0.0
        %508 = vmatpush.xpose.msra.mxu0 0.0
        %509 = vmatpush.xpose.msra.mxu0 0.0
        %510 = vmatpush.xpose.msra.mxu0 0.0
        %511 = vmatpush.xpose.msra.mxu0 0.0
        %512 = vmatpush.xpose.msra.mxu0 0.0
        %513 = vmatpush.xpose.msra.mxu0 0.0
        %514 = vmatpush.xpose.msra.mxu0 0.0
        %515 = vmatpush.xpose.msra.mxu0 0.0
        %516 = vmatpush.xpose.msra.mxu0 0.0
        %517 = vmatpush.xpose.msra.mxu0 0.0
        %518 = vmatpush.xpose.msra.mxu0 %v501
        %519 = vmatmul.f32.gmra.mxu0 %v498
        %v520 = vpop.f32.mrf.mxu0
        %v521 = vadd.f32 0.0, %v520
        %522 = vdwg.mxu0
        %v524 = vsel %vm391, %v419, 0
        %v527 = vsel %vm391, %v452, 0
        %529 = vmatpush.xpose.msra.mxu0 0.0
        %530 = vmatpush.xpose.msra.mxu0 0.0
        %531 = vmatpush.xpose.msra.mxu0 0.0
        %532 = vmatpush.xpose.msra.mxu0 0.0
        %533 = vmatpush.xpose.msra.mxu0 0.0
        %534 = vmatpush.xpose.msra.mxu0 0.0
        %535 = vmatpush.xpose.msra.mxu0 0.0
        %536 = vmatpush.xpose.msra.mxu0 0.0
        %537 = vmatpush.xpose.msra.mxu0 0.0
        %538 = vmatpush.xpose.msra.mxu0 0.0
        %539 = vmatpush.xpose.msra.mxu0 0.0
        %540 = vmatpush.xpose.msra.mxu0 0.0
        %541 = vmatpush.xpose.msra.mxu0 0.0
        %542 = vmatpush.xpose.msra.mxu0 0.0
        %543 = vmatpush.xpose.msra.mxu0 0.0
        %544 = vmatpush.xpose.msra.mxu0 %v527
        %545 = vmatmul.f32.gmra.mxu0 %v524
        %v546 = vpop.f32.mrf.mxu0
        %v547 = vadd.f32 0.0, %v546
        %548 = vdwg.mxu0
        %v549 = vmul.f32 %v521, 0.17677669
        %v550 = vmul.f32 %v547, 0.17677669
        %vm551 = vcmask 64512
        %v552 = vsel %vm551, %v549, -inf
        %553 = vmax.xlane.f32.xlu0 %v552
        %v554 = vpop.xlane.xlu0 %553
        %v555 = vsel %vm551, %v550, -inf
        %556 = vmax.xlane.f32.xlu0 %v555
        %v557 = vpop.xlane.xlu0 %556
        %v558 = vsub.f32 %v549, %v554
        %v559 = vsub.f32 %v550, %v557
        %v560 = vmul.f32 %v558, 1.442695
        %v561 = vpow.pop %v560
        %v562 = vmul.f32 %v559, 1.442695
        %v563 = vpow.pop %v562
        %v564 = vsel %vm551, %v561, 0.0
        %565 = vadd.xlane.f32.xlu0 %v564
        %v566 = vpop.xlane.xlu0 %565
        %v567 = vsel %vm551, %v563, 0.0
        %568 = vadd.xlane.f32.xlu0 %v567
        %v569 = vpop.xlane.xlu0 %568
        %v570 = vrcp.pop %v566
        %v571 = vmul.f32 %v566, %v570
        %v572 = vsub.f32 1.0, %v571
        %v573 = vmul.f32 %v570, %v572
        %v574 = vadd.f32 %v570, %v573
        %vm575 = vweird.f32 %v566
        %vm576 = vweird.f32 %v570
        %vm577 = vmor %vm575, %vm576
        %v578 = vsel %vm577, %v570, %v574
        %v579 = vand.u32 2147483647, %v566
        %vm580 = vcmp.eq.f32.partialorder %v579, 8.507059e+37
        %v581 = vand.u32 %v566, 2147483648
        %v582 = vor.u32 1.1754944e-38, %v581
        %v583 = vsel %vm580, %v582, %v578
        %v584 = vmul.f32 %v561, %v583
        %v585 = vrcp.pop %v569
        %v586 = vmul.f32 %v569, %v585
        %v587 = vsub.f32 1.0, %v586
        %v588 = vmul.f32 %v585, %v587
        %v589 = vadd.f32 %v585, %v588
        %vm590 = vweird.f32 %v569
        %vm591 = vweird.f32 %v585
        %vm592 = vmor %vm590, %vm591
        %v593 = vsel %vm592, %v585, %v589
        %v594 = vand.u32 2147483647, %v569
        %vm595 = vcmp.eq.f32.partialorder %v594, 8.507059e+37
        %v596 = vand.u32 %v569, 2147483648
        %v597 = vor.u32 1.1754944e-38, %v596
        %v598 = vsel %vm595, %v597, %v593
        %v599 = vmul.f32 %v563, %v598
        %v601 = vsel %vm551, %v584, 0
        %603 = vmatpush.msra.mxu0 0.0
        %604 = vmatpush.msra.mxu0 0.0
        %605 = vmatpush.msra.mxu0 0.0
        %606 = vmatpush.msra.mxu0 0.0
        %607 = vmatpush.msra.mxu0 0.0
        %608 = vmatpush.msra.mxu0 0.0
        %609 = vmatpush.msra.mxu0 0.0
        %610 = vmatpush.msra.mxu0 0.0
        %611 = vmatpush.msra.mxu0 0.0
        %612 = vmatpush.msra.mxu0 0.0
        %613 = vmatpush.msra.mxu0 0.0
        %614 = vmatpush.msra.mxu0 0.0
        %615 = vmatpush.msra.mxu0 0.0
        %616 = vmatpush.msra.mxu0 0.0
        %617 = vmatpush.msra.mxu0 0.0
        %618 = vmatpush.msra.mxu0 %v476
        %619 = vmatmul.f32.gmra.mxu0 %v601
        %v620 = vpop.f32.mrf.mxu0
        %v621 = vadd.f32 0.0, %v620
        %622 = vdwg.mxu0
        %v624 = vsel %vm551, %v599, 0
        %626 = vmatpush.msra.mxu0 0.0
        %627 = vmatpush.msra.mxu0 0.0
        %628 = vmatpush.msra.mxu0 0.0
        %629 = vmatpush.msra.mxu0 0.0
        %630 = vmatpush.msra.mxu0 0.0
        %631 = vmatpush.msra.mxu0 0.0
        %632 = vmatpush.msra.mxu0 0.0
        %633 = vmatpush.msra.mxu0 0.0
        %634 = vmatpush.msra.mxu0 0.0
        %635 = vmatpush.msra.mxu0 0.0
        %636 = vmatpush.msra.mxu0 0.0
        %637 = vmatpush.msra.mxu0 0.0
        %638 = vmatpush.msra.mxu0 0.0
        %639 = vmatpush.msra.mxu0 0.0
        %640 = vmatpush.msra.mxu0 0.0
        %641 = vmatpush.msra.mxu0 %v479
        %642 = vmatmul.f32.gmra.mxu0 %v624
        %v643 = vpop.f32.mrf.mxu0
        %v644 = vadd.f32 0.0, %v643
        %645 = vdwg.mxu0
        %646 = vrot.lane.b32.xlu0 %v416, 96
        %v647 = vpop.permute.xlu0 %646
        %648 = vrot.lane.b32.xlu0 %v449, 96
        %v649 = vpop.permute.xlu0 %648
        %v650 = vsel %vm391, %v647, 0
        %v652 = vsel %vm391, %v649, 0
        %654 = vmatpush.xpose.msra.mxu0 0.0
        %655 = vmatpush.xpose.msra.mxu0 0.0
        %656 = vmatpush.xpose.msra.mxu0 0.0
        %657 = vmatpush.xpose.msra.mxu0 0.0
        %658 = vmatpush.xpose.msra.mxu0 0.0
        %659 = vmatpush.xpose.msra.mxu0 0.0
        %660 = vmatpush.xpose.msra.mxu0 0.0
        %661 = vmatpush.xpose.msra.mxu0 0.0
        %662 = vmatpush.xpose.msra.mxu0 0.0
        %663 = vmatpush.xpose.msra.mxu0 0.0
        %664 = vmatpush.xpose.msra.mxu0 0.0
        %665 = vmatpush.xpose.msra.mxu0 0.0
        %666 = vmatpush.xpose.msra.mxu0 0.0
        %667 = vmatpush.xpose.msra.mxu0 0.0
        %668 = vmatpush.xpose.msra.mxu0 0.0
        %669 = vmatpush.xpose.msra.mxu0 %v652
        %670 = vmatmul.f32.gmra.mxu0 %v650
        %v671 = vpop.f32.mrf.mxu0
        %v672 = vadd.f32 0.0, %v671
        %673 = vdwg.mxu0
        %674 = vrot.lane.b32.xlu0 %v419, 96
        %v675 = vpop.permute.xlu0 %674
        %676 = vrot.lane.b32.xlu0 %v452, 96
        %v677 = vpop.permute.xlu0 %676
        %v678 = vsel %vm391, %v675, 0
        %v680 = vsel %vm391, %v677, 0
        %682 = vmatpush.xpose.msra.mxu0 0.0
        %683 = vmatpush.xpose.msra.mxu0 0.0
        %684 = vmatpush.xpose.msra.mxu0 0.0
        %685 = vmatpush.xpose.msra.mxu0 0.0
        %686 = vmatpush.xpose.msra.mxu0 0.0
        %687 = vmatpush.xpose.msra.mxu0 0.0
        %688 = vmatpush.xpose.msra.mxu0 0.0
        %689 = vmatpush.xpose.msra.mxu0 0.0
        %690 = vmatpush.xpose.msra.mxu0 0.0
        %691 = vmatpush.xpose.msra.mxu0 0.0
        %692 = vmatpush.xpose.msra.mxu0 0.0
        %693 = vmatpush.xpose.msra.mxu0 0.0
        %694 = vmatpush.xpose.msra.mxu0 0.0
        %695 = vmatpush.xpose.msra.mxu0 0.0
        %696 = vmatpush.xpose.msra.mxu0 0.0
        %697 = vmatpush.xpose.msra.mxu0 %v680
        %698 = vmatmul.f32.gmra.mxu0 %v678
        %v699 = vpop.f32.mrf.mxu0
        %v700 = vadd.f32 0.0, %v699
        %701 = vdwg.mxu0
        %v702 = vmul.f32 %v672, 0.17677669
        %v703 = vmul.f32 %v700, 0.17677669
        %v704 = vsel %vm551, %v702, -inf
        %705 = vmax.xlane.f32.xlu0 %v704
        %v706 = vpop.xlane.xlu0 %705
        %v707 = vsel %vm551, %v703, -inf
        %708 = vmax.xlane.f32.xlu0 %v707
        %v709 = vpop.xlane.xlu0 %708
        %v710 = vsub.f32 %v702, %v706
        %v711 = vsub.f32 %v703, %v709
        %v712 = vmul.f32 %v710, 1.442695
        %v713 = vpow.pop %v712
        %v714 = vmul.f32 %v711, 1.442695
        %v715 = vpow.pop %v714
        %v716 = vsel %vm551, %v713, 0.0
        %717 = vadd.xlane.f32.xlu0 %v716
        %v718 = vpop.xlane.xlu0 %717
        %v719 = vsel %vm551, %v715, 0.0
        %720 = vadd.xlane.f32.xlu0 %v719
        %v721 = vpop.xlane.xlu0 %720
        %v722 = vrcp.pop %v718
        %v723 = vmul.f32 %v718, %v722
        %v724 = vsub.f32 1.0, %v723
        %v725 = vmul.f32 %v722, %v724
        %v726 = vadd.f32 %v722, %v725
        %vm727 = vweird.f32 %v718
        %vm728 = vweird.f32 %v722
        %vm729 = vmor %vm727, %vm728
        %v730 = vsel %vm729, %v722, %v726
        %v731 = vand.u32 2147483647, %v718
        %vm732 = vcmp.eq.f32.partialorder %v731, 8.507059e+37
        %v733 = vand.u32 %v718, 2147483648
        %v734 = vor.u32 1.1754944e-38, %v733
        %v735 = vsel %vm732, %v734, %v730
        %v736 = vmul.f32 %v713, %v735
        %v737 = vrcp.pop %v721
        %v738 = vmul.f32 %v721, %v737
        %v739 = vsub.f32 1.0, %v738
        %v740 = vmul.f32 %v737, %v739
        %v741 = vadd.f32 %v737, %v740
        %vm742 = vweird.f32 %v721
        %vm743 = vweird.f32 %v737
        %vm744 = vmor %vm742, %vm743
        %v745 = vsel %vm744, %v737, %v741
        %v746 = vand.u32 2147483647, %v721
        %vm747 = vcmp.eq.f32.partialorder %v746, 8.507059e+37
        %v748 = vand.u32 %v721, 2147483648
        %v749 = vor.u32 1.1754944e-38, %v748
        %v750 = vsel %vm747, %v749, %v745
        %v751 = vmul.f32 %v715, %v750
        %753 = vrot.lane.b32.xlu0 %v476, 96
        %v754 = vpop.permute.xlu0 %753
        %v757 = vsel %vm551, %v736, 0
        %759 = vmatpush.msra.mxu0 0.0
        %760 = vmatpush.msra.mxu0 0.0
        %761 = vmatpush.msra.mxu0 0.0
        %762 = vmatpush.msra.mxu0 0.0
        %763 = vmatpush.msra.mxu0 0.0
        %764 = vmatpush.msra.mxu0 0.0
        %765 = vmatpush.msra.mxu0 0.0
        %766 = vmatpush.msra.mxu0 0.0
        %767 = vmatpush.msra.mxu0 0.0
        %768 = vmatpush.msra.mxu0 0.0
        %769 = vmatpush.msra.mxu0 0.0
        %770 = vmatpush.msra.mxu0 0.0
        %771 = vmatpush.msra.mxu0 0.0
        %772 = vmatpush.msra.mxu0 0.0
        %773 = vmatpush.msra.mxu0 0.0
        %774 = vmatpush.msra.mxu0 %v754
        %775 = vmatmul.f32.gmra.mxu0 %v757
        %v776 = vpop.f32.mrf.mxu0
        %v777 = vadd.f32 0.0, %v776
        %778 = vdwg.mxu0
        %780 = vrot.lane.b32.xlu0 %v479, 96
        %v781 = vpop.permute.xlu0 %780
        %v784 = vsel %vm551, %v751, 0
        %786 = vmatpush.msra.mxu0 0.0
        %787 = vmatpush.msra.mxu0 0.0
        %788 = vmatpush.msra.mxu0 0.0
        %789 = vmatpush.msra.mxu0 0.0
        %790 = vmatpush.msra.mxu0 0.0
        %791 = vmatpush.msra.mxu0 0.0
        %792 = vmatpush.msra.mxu0 0.0
        %793 = vmatpush.msra.mxu0 0.0
        %794 = vmatpush.msra.mxu0 0.0
        %795 = vmatpush.msra.mxu0 0.0
        %796 = vmatpush.msra.mxu0 0.0
        %797 = vmatpush.msra.mxu0 0.0
        %798 = vmatpush.msra.mxu0 0.0
        %799 = vmatpush.msra.mxu0 0.0
        %800 = vmatpush.msra.mxu0 0.0
        %801 = vmatpush.msra.mxu0 %v781
        %802 = vmatmul.f32.gmra.mxu0 %v784
        %v803 = vpop.f32.mrf.mxu0
        %v804 = vadd.f32 0.0, %v803
        %805 = vdwg.mxu0
        %v807 = vsel %vm391, %v777, 0
        %v810 = vsel %vm391, %v804, 0
        %812 = vmatpush.msra.mxu0 0.0
        %813 = vmatpush.msra.mxu0 0.0
        %814 = vmatpush.msra.mxu0 0.0
        %815 = vmatpush.msra.mxu0 0.0
        %816 = vmatpush.msra.mxu0 0.0
        %817 = vmatpush.msra.mxu0 0.0
        %818 = vmatpush.msra.mxu0 0.0
        %819 = vmatpush.msra.mxu0 0.0
        %820 = vmatpush.msra.mxu0 0.0
        %821 = vmatpush.msra.mxu0 0.0
        %822 = vmatpush.msra.mxu0 0.0
        %823 = vmatpush.msra.mxu0 0.0
        %824 = vmatpush.msra.mxu0 %v488
        %825 = vmatpush.msra.mxu0 %v487
        %826 = vmatpush.msra.mxu0 %v486
        %827 = vmatpush.msra.mxu0 %v485
        %828 = vmatmul.f32.gmra.mxu0 %v807
        %v829 = vpop.f32.mrf.mxu0
        %v830 = vadd.f32 0.0, %v829
        %831 = vmatmul.f32.gmra.mxu0 %v810
        %v832 = vpop.f32.mrf.mxu0
        %v833 = vadd.f32 0.0, %v832
        %834 = vdwg.mxu0
        %v836 = vsel %vm391, %v621, 0
        %v839 = vsel %vm391, %v644, 0
        %841 = vmatpush.msra.mxu0 0.0
        %842 = vmatpush.msra.mxu0 0.0
        %843 = vmatpush.msra.mxu0 0.0
        %844 = vmatpush.msra.mxu0 0.0
        %845 = vmatpush.msra.mxu0 0.0
        %846 = vmatpush.msra.mxu0 0.0
        %847 = vmatpush.msra.mxu0 0.0
        %848 = vmatpush.msra.mxu0 0.0
        %849 = vmatpush.msra.mxu0 0.0
        %850 = vmatpush.msra.mxu0 0.0
        %851 = vmatpush.msra.mxu0 0.0
        %852 = vmatpush.msra.mxu0 0.0
        %853 = vmatpush.msra.mxu0 %v484
        %854 = vmatpush.msra.mxu0 %v483
        %855 = vmatpush.msra.mxu0 %v482
        %856 = vmatpush.msra.mxu0 %v481
        %857 = vmatmul.f32.gmra.mxu0 %v836
        %v858 = vpop.f32.mrf.mxu0
        %v859 = vadd.f32 %v830, %v858
        %860 = vmatmul.f32.gmra.mxu0 %v839
        %v861 = vpop.f32.mrf.mxu0
        %v862 = vadd.f32 %v833, %v861
        %863 = vdwg.mxu0
        %864 = vrot.lane.b32.xlu0 %v416, 64
        %v865 = vpop.permute.xlu0 %864
        %866 = vrot.lane.b32.xlu0 %v449, 64
        %v867 = vpop.permute.xlu0 %866
        %v868 = vsel %vm391, %v865, 0
        %v870 = vsel %vm391, %v867, 0
        %872 = vmatpush.xpose.msra.mxu0 0.0
        %873 = vmatpush.xpose.msra.mxu0 0.0
        %874 = vmatpush.xpose.msra.mxu0 0.0
        %875 = vmatpush.xpose.msra.mxu0 0.0
        %876 = vmatpush.xpose.msra.mxu0 0.0
        %877 = vmatpush.xpose.msra.mxu0 0.0
        %878 = vmatpush.xpose.msra.mxu0 0.0
        %879 = vmatpush.xpose.msra.mxu0 0.0
        %880 = vmatpush.xpose.msra.mxu0 0.0
        %881 = vmatpush.xpose.msra.mxu0 0.0
        %882 = vmatpush.xpose.msra.mxu0 0.0
        %883 = vmatpush.xpose.msra.mxu0 0.0
        %884 = vmatpush.xpose.msra.mxu0 0.0
        %885 = vmatpush.xpose.msra.mxu0 0.0
        %886 = vmatpush.xpose.msra.mxu0 0.0
        %887 = vmatpush.xpose.msra.mxu0 %v870
        %888 = vmatmul.f32.gmra.mxu0 %v868
        %v889 = vpop.f32.mrf.mxu0
        %v890 = vadd.f32 0.0, %v889
        %891 = vdwg.mxu0
        %892 = vrot.lane.b32.xlu0 %v419, 64
        %v893 = vpop.permute.xlu0 %892
        %894 = vrot.lane.b32.xlu0 %v452, 64
        %v895 = vpop.permute.xlu0 %894
        %v896 = vsel %vm391, %v893, 0
        %v898 = vsel %vm391, %v895, 0
        %900 = vmatpush.xpose.msra.mxu0 0.0
        %901 = vmatpush.xpose.msra.mxu0 0.0
        %902 = vmatpush.xpose.msra.mxu0 0.0
        %903 = vmatpush.xpose.msra.mxu0 0.0
        %904 = vmatpush.xpose.msra.mxu0 0.0
        %905 = vmatpush.xpose.msra.mxu0 0.0
        %906 = vmatpush.xpose.msra.mxu0 0.0
        %907 = vmatpush.xpose.msra.mxu0 0.0
        %908 = vmatpush.xpose.msra.mxu0 0.0
        %909 = vmatpush.xpose.msra.mxu0 0.0
        %910 = vmatpush.xpose.msra.mxu0 0.0
        %911 = vmatpush.xpose.msra.mxu0 0.0
        %912 = vmatpush.xpose.msra.mxu0 0.0
        %913 = vmatpush.xpose.msra.mxu0 0.0
        %914 = vmatpush.xpose.msra.mxu0 0.0
        %915 = vmatpush.xpose.msra.mxu0 %v898
        %916 = vmatmul.f32.gmra.mxu0 %v896
        %v917 = vpop.f32.mrf.mxu0
        %v918 = vadd.f32 0.0, %v917
        %919 = vdwg.mxu0
        %v920 = vmul.f32 %v890, 0.17677669
        %v921 = vmul.f32 %v918, 0.17677669
        %v922 = vsel %vm551, %v920, -inf
        %923 = vmax.xlane.f32.xlu0 %v922
        %v924 = vpop.xlane.xlu0 %923
        %v925 = vsel %vm551, %v921, -inf
        %926 = vmax.xlane.f32.xlu0 %v925
        %v927 = vpop.xlane.xlu0 %926
        %v928 = vsub.f32 %v920, %v924
        %v929 = vsub.f32 %v921, %v927
        %v930 = vmul.f32 %v928, 1.442695
        %v931 = vpow.pop %v930
        %v932 = vmul.f32 %v929, 1.442695
        %v933 = vpow.pop %v932
        %v934 = vsel %vm551, %v931, 0.0
        %935 = vadd.xlane.f32.xlu0 %v934
        %v936 = vpop.xlane.xlu0 %935
        %v937 = vsel %vm551, %v933, 0.0
        %938 = vadd.xlane.f32.xlu0 %v937
        %v939 = vpop.xlane.xlu0 %938
        %v940 = vrcp.pop %v936
        %v941 = vmul.f32 %v936, %v940
        %v942 = vsub.f32 1.0, %v941
        %v943 = vmul.f32 %v940, %v942
        %v944 = vadd.f32 %v940, %v943
        %vm945 = vweird.f32 %v936
        %vm946 = vweird.f32 %v940
        %vm947 = vmor %vm945, %vm946
        %v948 = vsel %vm947, %v940, %v944
        %v949 = vand.u32 2147483647, %v936
        %vm950 = vcmp.eq.f32.partialorder %v949, 8.507059e+37
        %v951 = vand.u32 %v936, 2147483648
        %v952 = vor.u32 1.1754944e-38, %v951
        %v953 = vsel %vm950, %v952, %v948
        %v954 = vmul.f32 %v931, %v953
        %v955 = vrcp.pop %v939
        %v956 = vmul.f32 %v939, %v955
        %v957 = vsub.f32 1.0, %v956
        %v958 = vmul.f32 %v955, %v957
        %v959 = vadd.f32 %v955, %v958
        %vm960 = vweird.f32 %v939
        %vm961 = vweird.f32 %v955
        %vm962 = vmor %vm960, %vm961
        %v963 = vsel %vm962, %v955, %v959
        %v964 = vand.u32 2147483647, %v939
        %vm965 = vcmp.eq.f32.partialorder %v964, 8.507059e+37
        %v966 = vand.u32 %v939, 2147483648
        %v967 = vor.u32 1.1754944e-38, %v966
        %v968 = vsel %vm965, %v967, %v963
        %v969 = vmul.f32 %v933, %v968
        %970 = vrot.lane.b32.xlu0 %v476, 64
        %v971 = vpop.permute.xlu0 %970
        %v974 = vsel %vm551, %v954, 0
        %976 = vmatpush.msra.mxu0 0.0
        %977 = vmatpush.msra.mxu0 0.0
        %978 = vmatpush.msra.mxu0 0.0
        %979 = vmatpush.msra.mxu0 0.0
        %980 = vmatpush.msra.mxu0 0.0
        %981 = vmatpush.msra.mxu0 0.0
        %982 = vmatpush.msra.mxu0 0.0
        %983 = vmatpush.msra.mxu0 0.0
        %984 = vmatpush.msra.mxu0 0.0
        %985 = vmatpush.msra.mxu0 0.0
        %986 = vmatpush.msra.mxu0 0.0
        %987 = vmatpush.msra.mxu0 0.0
        %988 = vmatpush.msra.mxu0 0.0
        %989 = vmatpush.msra.mxu0 0.0
        %990 = vmatpush.msra.mxu0 0.0
        %991 = vmatpush.msra.mxu0 %v971
        %992 = vmatmul.f32.gmra.mxu0 %v974
        %v993 = vpop.f32.mrf.mxu0
        %v994 = vadd.f32 0.0, %v993
        %995 = vdwg.mxu0
        %996 = vrot.lane.b32.xlu0 %v479, 64
        %v997 = vpop.permute.xlu0 %996
        %v1000 = vsel %vm551, %v969, 0
        %1002 = vmatpush.msra.mxu0 0.0
        %1003 = vmatpush.msra.mxu0 0.0
        %1004 = vmatpush.msra.mxu0 0.0
        %1005 = vmatpush.msra.mxu0 0.0
        %1006 = vmatpush.msra.mxu0 0.0
        %1007 = vmatpush.msra.mxu0 0.0
        %1008 = vmatpush.msra.mxu0 0.0
        %1009 = vmatpush.msra.mxu0 0.0
        %1010 = vmatpush.msra.mxu0 0.0
        %1011 = vmatpush.msra.mxu0 0.0
        %1012 = vmatpush.msra.mxu0 0.0
        %1013 = vmatpush.msra.mxu0 0.0
        %1014 = vmatpush.msra.mxu0 0.0
        %1015 = vmatpush.msra.mxu0 0.0
        %1016 = vmatpush.msra.mxu0 0.0
        %1017 = vmatpush.msra.mxu0 %v997
        %1018 = vmatmul.f32.gmra.mxu0 %v1000
        %v1019 = vpop.f32.mrf.mxu0
        %v1020 = vadd.f32 0.0, %v1019
        %1021 = vdwg.mxu0
        %v1023 = vsel %vm391, %v994, 0
        %v1026 = vsel %vm391, %v1020, 0
        %1028 = vmatpush.msra.mxu0 0.0
        %1029 = vmatpush.msra.mxu0 0.0
        %1030 = vmatpush.msra.mxu0 0.0
        %1031 = vmatpush.msra.mxu0 0.0
        %1032 = vmatpush.msra.mxu0 0.0
        %1033 = vmatpush.msra.mxu0 0.0
        %1034 = vmatpush.msra.mxu0 0.0
        %1035 = vmatpush.msra.mxu0 0.0
        %1036 = vmatpush.msra.mxu0 0.0
        %1037 = vmatpush.msra.mxu0 0.0
        %1038 = vmatpush.msra.mxu0 0.0
        %1039 = vmatpush.msra.mxu0 0.0
        %1040 = vmatpush.msra.mxu0 %v492
        %1041 = vmatpush.msra.mxu0 %v491
        %1042 = vmatpush.msra.mxu0 %v490
        %1043 = vmatpush.msra.mxu0 %v489
        %1044 = vmatmul.f32.gmra.mxu0 %v1023
        %v1045 = vpop.f32.mrf.mxu0
        %v1046 = vadd.f32 0.0, %v1045
        %1047 = vmatmul.f32.gmra.mxu0 %v1026
        %v1048 = vpop.f32.mrf.mxu0
        %v1049 = vadd.f32 0.0, %v1048
        %1050 = vdwg.mxu0
        %v1051 = vadd.f32 %v859, %v1046
        %v1052 = vadd.f32 %v862, %v1049
        %1053 = vrot.lane.b32.xlu0 %v416, 32
        %v1054 = vpop.permute.xlu0 %1053
        %1055 = vrot.lane.b32.xlu0 %v449, 32
        %v1056 = vpop.permute.xlu0 %1055
        %v1057 = vsel %vm391, %v1054, 0
        %v1059 = vsel %vm391, %v1056, 0
        %1061 = vmatpush.xpose.msra.mxu0 0.0
        %1062 = vmatpush.xpose.msra.mxu0 0.0
        %1063 = vmatpush.xpose.msra.mxu0 0.0
        %1064 = vmatpush.xpose.msra.mxu0 0.0
        %1065 = vmatpush.xpose.msra.mxu0 0.0
        %1066 = vmatpush.xpose.msra.mxu0 0.0
        %1067 = vmatpush.xpose.msra.mxu0 0.0
        %1068 = vmatpush.xpose.msra.mxu0 0.0
        %1069 = vmatpush.xpose.msra.mxu0 0.0
        %1070 = vmatpush.xpose.msra.mxu0 0.0
        %1071 = vmatpush.xpose.msra.mxu0 0.0
        %1072 = vmatpush.xpose.msra.mxu0 0.0
        %1073 = vmatpush.xpose.msra.mxu0 0.0
        %1074 = vmatpush.xpose.msra.mxu0 0.0
        %1075 = vmatpush.xpose.msra.mxu0 0.0
        %1076 = vmatpush.xpose.msra.mxu0 %v1059
        %1077 = vmatmul.f32.gmra.mxu0 %v1057
        %v1078 = vpop.f32.mrf.mxu0
        %v1079 = vadd.f32 0.0, %v1078
        %1080 = vdwg.mxu0
        %1081 = vrot.lane.b32.xlu0 %v419, 32
        %v1082 = vpop.permute.xlu0 %1081
        %1083 = vrot.lane.b32.xlu0 %v452, 32
        %v1084 = vpop.permute.xlu0 %1083
        %v1085 = vsel %vm391, %v1082, 0
        %v1087 = vsel %vm391, %v1084, 0
        %1089 = vmatpush.xpose.msra.mxu0 0.0
        %1090 = vmatpush.xpose.msra.mxu0 0.0
        %1091 = vmatpush.xpose.msra.mxu0 0.0
        %1092 = vmatpush.xpose.msra.mxu0 0.0
        %1093 = vmatpush.xpose.msra.mxu0 0.0
        %1094 = vmatpush.xpose.msra.mxu0 0.0
        %1095 = vmatpush.xpose.msra.mxu0 0.0
        %1096 = vmatpush.xpose.msra.mxu0 0.0
        %1097 = vmatpush.xpose.msra.mxu0 0.0
        %1098 = vmatpush.xpose.msra.mxu0 0.0
        %1099 = vmatpush.xpose.msra.mxu0 0.0
        %1100 = vmatpush.xpose.msra.mxu0 0.0
        %1101 = vmatpush.xpose.msra.mxu0 0.0
        %1102 = vmatpush.xpose.msra.mxu0 0.0
        %1103 = vmatpush.xpose.msra.mxu0 0.0
        %1104 = vmatpush.xpose.msra.mxu0 %v1087
        %1105 = vmatmul.f32.gmra.mxu0 %v1085
        %v1106 = vpop.f32.mrf.mxu0
        %v1107 = vadd.f32 0.0, %v1106
        %1108 = vdwg.mxu0
        %v1109 = vmul.f32 %v1079, 0.17677669
        %v1110 = vmul.f32 %v1107, 0.17677669
        %v1111 = vsel %vm551, %v1109, -inf
        %1112 = vmax.xlane.f32.xlu0 %v1111
        %v1113 = vpop.xlane.xlu0 %1112
        %v1114 = vsel %vm551, %v1110, -inf
        %1115 = vmax.xlane.f32.xlu0 %v1114
        %v1116 = vpop.xlane.xlu0 %1115
        %v1117 = vsub.f32 %v1109, %v1113
        %v1118 = vsub.f32 %v1110, %v1116
        %v1119 = vmul.f32 %v1117, 1.442695
        %v1120 = vpow.pop %v1119
        %v1121 = vmul.f32 %v1118, 1.442695
        %v1122 = vpow.pop %v1121
        %v1123 = vsel %vm551, %v1120, 0.0
        %1124 = vadd.xlane.f32.xlu0 %v1123
        %v1125 = vpop.xlane.xlu0 %1124
        %v1126 = vsel %vm551, %v1122, 0.0
        %1127 = vadd.xlane.f32.xlu0 %v1126
        %v1128 = vpop.xlane.xlu0 %1127
        %v1129 = vrcp.pop %v1125
        %v1130 = vmul.f32 %v1125, %v1129
        %v1131 = vsub.f32 1.0, %v1130
        %v1132 = vmul.f32 %v1129, %v1131
        %v1133 = vadd.f32 %v1129, %v1132
        %vm1134 = vweird.f32 %v1125
        %vm1135 = vweird.f32 %v1129
        %vm1136 = vmor %vm1134, %vm1135
        %v1137 = vsel %vm1136, %v1129, %v1133
        %v1138 = vand.u32 2147483647, %v1125
        %vm1139 = vcmp.eq.f32.partialorder %v1138, 8.507059e+37
        %v1140 = vand.u32 %v1125, 2147483648
        %v1141 = vor.u32 1.1754944e-38, %v1140
        %v1142 = vsel %vm1139, %v1141, %v1137
        %v1143 = vmul.f32 %v1120, %v1142
        %v1144 = vrcp.pop %v1128
        %v1145 = vmul.f32 %v1128, %v1144
        %v1146 = vsub.f32 1.0, %v1145
        %v1147 = vmul.f32 %v1144, %v1146
        %v1148 = vadd.f32 %v1144, %v1147
        %vm1149 = vweird.f32 %v1128
        %vm1150 = vweird.f32 %v1144
        %vm1151 = vmor %vm1149, %vm1150
        %v1152 = vsel %vm1151, %v1144, %v1148
        %v1153 = vand.u32 2147483647, %v1128
        %vm1154 = vcmp.eq.f32.partialorder %v1153, 8.507059e+37
        %v1155 = vand.u32 %v1128, 2147483648
        %v1156 = vor.u32 1.1754944e-38, %v1155
        %v1157 = vsel %vm1154, %v1156, %v1152
        %v1158 = vmul.f32 %v1122, %v1157
        %1159 = vrot.lane.b32.xlu0 %v476, 32
        %v1160 = vpop.permute.xlu0 %1159
        %v1163 = vsel %vm551, %v1143, 0
        %1165 = vmatpush.msra.mxu0 0.0
        %1166 = vmatpush.msra.mxu0 0.0
        %1167 = vmatpush.msra.mxu0 0.0
        %1168 = vmatpush.msra.mxu0 0.0
        %1169 = vmatpush.msra.mxu0 0.0
        %1170 = vmatpush.msra.mxu0 0.0
        %1171 = vmatpush.msra.mxu0 0.0
        %1172 = vmatpush.msra.mxu0 0.0
        %1173 = vmatpush.msra.mxu0 0.0
        %1174 = vmatpush.msra.mxu0 0.0
        %1175 = vmatpush.msra.mxu0 0.0
        %1176 = vmatpush.msra.mxu0 0.0
        %1177 = vmatpush.msra.mxu0 0.0
        %1178 = vmatpush.msra.mxu0 0.0
        %1179 = vmatpush.msra.mxu0 0.0
        %1180 = vmatpush.msra.mxu0 %v1160
        %1181 = vmatmul.f32.gmra.mxu0 %v1163
        %v1182 = vpop.f32.mrf.mxu0
        %v1183 = vadd.f32 0.0, %v1182
        %1184 = vdwg.mxu0
        %1185 = vrot.lane.b32.xlu0 %v479, 32
        %v1186 = vpop.permute.xlu0 %1185
        %v1189 = vsel %vm551, %v1158, 0
        %1191 = vmatpush.msra.mxu0 0.0
        %1192 = vmatpush.msra.mxu0 0.0
        %1193 = vmatpush.msra.mxu0 0.0
        %1194 = vmatpush.msra.mxu0 0.0
        %1195 = vmatpush.msra.mxu0 0.0
        %1196 = vmatpush.msra.mxu0 0.0
        %1197 = vmatpush.msra.mxu0 0.0
        %1198 = vmatpush.msra.mxu0 0.0
        %1199 = vmatpush.msra.mxu0 0.0
        %1200 = vmatpush.msra.mxu0 0.0
        %1201 = vmatpush.msra.mxu0 0.0
        %1202 = vmatpush.msra.mxu0 0.0
        %1203 = vmatpush.msra.mxu0 0.0
        %1204 = vmatpush.msra.mxu0 0.0
        %1205 = vmatpush.msra.mxu0 0.0
        %1206 = vmatpush.msra.mxu0 %v1186
        %1207 = vmatmul.f32.gmra.mxu0 %v1189
        %v1208 = vpop.f32.mrf.mxu0
        %v1209 = vadd.f32 0.0, %v1208
        %1210 = vdwg.mxu0
        %v1212 = vsel %vm391, %v1183, 0
        %v1215 = vsel %vm391, %v1209, 0
        %1217 = vmatpush.msra.mxu0 0.0
        %1218 = vmatpush.msra.mxu0 0.0
        %1219 = vmatpush.msra.mxu0 0.0
        %1220 = vmatpush.msra.mxu0 0.0
        %1221 = vmatpush.msra.mxu0 0.0
        %1222 = vmatpush.msra.mxu0 0.0
        %1223 = vmatpush.msra.mxu0 0.0
        %1224 = vmatpush.msra.mxu0 0.0
        %1225 = vmatpush.msra.mxu0 0.0
        %1226 = vmatpush.msra.mxu0 0.0
        %1227 = vmatpush.msra.mxu0 0.0
        %1228 = vmatpush.msra.mxu0 0.0
        %1229 = vmatpush.msra.mxu0 %v496
        %1230 = vmatpush.msra.mxu0 %v495
        %1231 = vmatpush.msra.mxu0 %v494
        %1232 = vmatpush.msra.mxu0 %v493
        %1233 = vmatmul.f32.gmra.mxu0 %v1212
        %v1234 = vpop.f32.mrf.mxu0
        %v1235 = vadd.f32 0.0, %v1234
        %1236 = vmatmul.f32.gmra.mxu0 %v1215
        %v1237 = vpop.f32.mrf.mxu0
        %v1238 = vadd.f32 0.0, %v1237
        %1239 = vdwg.mxu0
        %v1240 = vadd.f32 %v1051, %v1235
        %v1241 = vadd.f32 %v1052, %v1238
        %1242 = vst [vmem:[%s379] sm:$0xff] %v1240
        %1243 = vst [vmem:[%s379 + $0x8] sm:$0xff] %v1241
        %s1244 = sand.u32 %s172, 1
        %s1245 = scalar_lea.sflag [#allocation4], %s1244
        %s1246 = sand.u32 %s172, 1
        %s1247 = smul.addr %s1246, 16
        %s1248 = scalar_lea.vmem [#allocation13], %s1247
        // Predicated region
        $region69: #{tpu_custom_call.1} parent=43 // pred_check
          %p1249 = pneg %p182
        $region70: #{tpu_custom_call.1} parent=43 // pred_check_branch
          %1251 = sbr.rel (%p1249) target = $region72
        $region71: #{tpu_custom_call.1} parent=43 // pred_region
          %s1252 = smul.u32 2, %s28
          %1254 = vsyncadd %s1245, 0
          %s1255 = smul.addr %s1252, 8
          %s1256 = scalar_lea.hbm %s6, %s1255
          %s1257 = sshll.u32 %s1248, 4
          %s1258 = int_to_ptr.vmem [resolvable:$true] %s1257
          %s1259 = sshll.u32 %s1256, 4
          %s1260 = int_to_ptr.hbm [resolvable:$true] %s1259
          %1265 = dma.vmem_to_hbm [thread:$0]  %s1258, 256, %s1260, %s1245, 128, 128, 8
        $region72: #{tpu_custom_call.1} parent=43 // pred_fallthru
          _
      $region44: #{tpu_custom_call.1} parent=5 // pred_fallthru
        _
      %p1266 = scmp.le.s32.totalorder 2, %s23
      // Predicated region
      $region73: #{tpu_custom_call.1} parent=5 // pred_check
        %p1267 = pneg %p1266
      $region74: #{tpu_custom_call.1} parent=5 // pred_check_branch
        %1269 = sbr.rel (%p1267) target = $region76
      $region75: #{tpu_custom_call.1} parent=5 // pred_region
        %s1270 = ssub.s32 %s23, 2
        // Predicated region
        $region77: #{tpu_custom_call.1} parent=75 // pred_check
          %p1271 = pneg %p188
        $region78: #{tpu_custom_call.1} parent=75 // pred_check_branch
          %1273 = sbr.rel (%p1271) target = $region80
        $region79: #{tpu_custom_call.1} parent=75 // pred_region
          %s1274 = sand.u32 %s173, 1
          %s1275 = scalar_lea.sflag [#allocation4], %s1274
          %s1276 = sand.u32 %s173, 1
          %s1277 = smul.addr %s1276, 16
          %s1278 = scalar_lea.vmem [#allocation13], %s1277
          %1280 = dma.done %s1275, 256
        $region80: #{tpu_custom_call.1} parent=75 // pred_fallthru
          _
      $region76: #{tpu_custom_call.1} parent=5 // pred_fallthru
        _
    $region6: #{tpu_custom_call.1} parent=1 // loop_footer
      %s27 = sadd.s32 1, %s23
    $region7: #{tpu_custom_call.1} parent=1 // loop_footer_branch
      %22 = sbr.rel target = $region3
    $region8: #{tpu_custom_call.1} parent=1 // loop_exit
      _
    %1281 = vsyncpa [#allocation3], 1
    %s1282 = scalar_lea.sflag [#allocation3], 1
    %1283 = vsyncpa %s1282, 1
    %1284 = vsyncpa [#allocation6], 1
    %s1285 = scalar_lea.sflag [#allocation6], 1
    %1286 = vsyncpa %s1285, 1
    %1287 = vsyncpa [#allocation9], 1
    %1288 = vsyncpa [#allocation12], 1
    %1289 = vsyncpa [#allocation4], 1
    %s1290 = scalar_lea.sflag [#allocation4], 1
    %1291 = vsyncpa %s1290, 1

</llo_original>
